<compile_context>
chip_gen: v6e
topology: v6e:2x2x1
jax: 0.10.0
libtpu: 0.0.40
codegen_flags: <defaults>
</compile_context>

<pallas_src>
import functools

import jax
import jax.numpy as jnp
from jax import lax
from jax.experimental import pallas as pl
from jax.experimental.pallas import tpu as pltpu

HEADS = 8
NEG_SLOPE = 0.2      # HANConv default negative_slope
BN_EPS = 1e-5        # nn.BatchNorm1d default eps
NEG_INF = -1e30      # f32-safe mask sentinel
# HANConv default dropout = 0.0 -> no dropout applied.


# ----------------------------- pallas plumbing -----------------------------

def _full_spec(shape):
    nd = len(shape)
    return pl.BlockSpec(shape, (lambda _nd: (lambda i: (0,) * _nd))(nd))


def _call(kernel, out_shape, *inputs):
    return pl.pallas_call(
        kernel,
        grid=(1,),
        in_specs=[_full_spec(x.shape) for x in inputs],
        out_specs=_full_spec(out_shape),
        out_shape=jax.ShapeDtypeStruct(out_shape, jnp.float32),
        compiler_params=pltpu.CompilerParams(
            dimension_semantics=("arbitrary",)),
    )(*inputs)


# --------------------------------- kernels ---------------------------------

def _edge_attn_kernel(xs_ref, xd_ref, wst_ref, bs_ref, wdt_ref, bd_ref,
                      asrc_ref, adst_ref, mask_ref, o_ref, *, heads, d):
    # Fused: projection of raw src/dst features + multi-head edge attention
    # (dense masked softmax over sources) + sum aggregation + ReLU.
    #   xs_ref: [Ns, Cin]   xd_ref: [Nd, Cin]
    #   wst/wdt: [Cin, H*D] (W^T)     bs/bd: [1, H*D]
    #   asrc/adst: [H, H*D] block-row attention weights
    #     (row h holds lin_src[h, :] in columns [h*D:(h+1)*D], zero elsewhere)
    #   mask: [Nd, Ns] dense {0,1} adjacency
    xs = jnp.dot(xs_ref[...], wst_ref[...],
                 preferred_element_type=jnp.float32) + bs_ref[...]   # [Ns, H*D]
    xd = jnp.dot(xd_ref[...], wdt_ref[...],
                 preferred_element_type=jnp.float32) + bd_ref[...]   # [Nd, H*D]

    # All-head attention logits via block-structured matmuls (single MXU ops).
    # a_src_t[h, j] = <x_src[j, h, :], lin_src[h, :]>   -> [H, Ns]
    # a_dst[i, h]   = <x_dst[i, h, :], lin_dst[h, :]>   -> [Nd, H]
    a_src_t = lax.dot_general(asrc_ref[...], xs, (((1,), (1,)), ((), ())),
                              preferred_element_type=jnp.float32)    # [H, Ns]
    a_dst = lax.dot_general(xd, adst_ref[...], (((1,), (1,)), ((), ())),
                            preferred_element_type=jnp.float32)      # [Nd, H]

    mb = mask_ref[...] > 0.5
    neg = jnp.float32(NEG_INF)

    outs = []
    for h in range(heads):
        e = a_dst[:, h:h + 1] + a_src_t[h:h + 1, :]                  # [Nd, Ns]
        # leaky_relu + edge mask folded into nested selects
        e = jnp.where(mb, jnp.where(e >= 0.0, e, NEG_SLOPE * e), neg)
        m = jnp.max(e, axis=1, keepdims=True)
        p = jnp.where(mb, jnp.exp(e - m), 0.0)
        s = jnp.sum(p, axis=1, keepdims=True)
        attn = p * pl.reciprocal(jnp.maximum(s, jnp.float32(1e-30)),
                                 approx=True)   # rows w/o edges -> zeros
        outs.append(jnp.dot(attn, xs[:, h * d:(h + 1) * d],
                            preferred_element_type=jnp.float32))     # [Nd, D]

    # single lane-dense store of the full [Nd, H*D] slab, then F.relu
    o_ref[...] = jnp.maximum(jnp.concatenate(outs, axis=1), 0.0)


def _semantic_bn_kernel(flat_ref, wkt_ref, bk_ref, q_ref, g_ref, b_ref, o_ref,
                        *, num_rel, n):
    # Fused PyG HANConv `group()` (semantic attention over edge types) +
    # nn.BatchNorm1d (training-mode batch statistics, biased variance).
    #   flat: [T*N, F]  per-edge-type outputs stacked row-major by type
    #   wkt:  [F, F] (k_lin W^T)   bk, q, g, b: [1, F]
    flat = flat_ref[...]
    k = jnp.tanh(jnp.dot(flat, wkt_ref[...],
                         preferred_element_type=jnp.float32) + bk_ref[...])
    qk = jnp.sum(k * q_ref[...], axis=1, keepdims=True)              # [T*N, 1]

    scores = []
    for t in range(num_rel):
        s_t = jnp.sum(qk[t * n:(t + 1) * n, :], axis=0,
                      keepdims=True) / float(n)                      # [1, 1]
        scores.append(s_t)
    m = scores[0]
    for s in scores[1:]:
        m = jnp.maximum(m, s)
    exps = [jnp.exp(s - m) for s in scores]
    z = exps[0]
    for e in exps[1:]:
        z = z + e
    inv_z = pl.reciprocal(z, approx=True)                            # [1, 1]

    acc = jnp.zeros((n, flat_ref.shape[1]), jnp.float32)
    for t in range(num_rel):
        acc = acc + (exps[t] * inv_z) * flat[t * n:(t + 1) * n, :]

    # BatchNorm1d forward (training mode).
    # TODO(synk): running_mean/running_var state update is not materialized.
    mean = jnp.sum(acc, axis=0, keepdims=True) / float(n)
    xc = acc - mean
    var = jnp.sum(xc * xc, axis=0, keepdims=True) / float(n)
    inv = lax.rsqrt(var + BN_EPS)
    o_ref[...] = xc * inv * g_ref[...] + b_ref[...]


def _classifier_kernel(er_ref, ec_ref, o_ref):
    # sigmoid(sum(edge_feat_req * edge_feat_code, -1))
    s = jnp.sum(er_ref[...] * ec_ref[...], axis=1, keepdims=True)    # [E, 1]
    o_ref[...] = 1.0 / (1.0 + jnp.exp(-s))


# ------------------------------ thin wrappers -------------------------------

def edge_attention(x_src, x_dst, wsrc_t, bsrc, wdst_t, bdst,
                   asrc_blk, adst_blk, mask, heads=HEADS):
    d = wsrc_t.shape[1] // heads
    kern = functools.partial(_edge_attn_kernel, heads=heads, d=d)
    return _call(kern, (x_dst.shape[0], wsrc_t.shape[1]),
                 x_src, x_dst, wsrc_t, bsrc, wdst_t, bdst,
                 asrc_blk, adst_blk, mask)


def semantic_bn(flat, wkt, bk, q, gamma, beta, *, num_rel, n):
    kern = functools.partial(_semantic_bn_kernel, num_rel=num_rel, n=n)
    return _call(kern, (n, flat.shape[1]), flat, wkt, bk, q, gamma, beta)


def classifier(edge_feat_req, edge_feat_code):
    out = _call(_classifier_kernel, (edge_feat_req.shape[0], 1),
                edge_feat_req, edge_feat_code)
    return out[:, 0]


# ------------------------------ parameters ----------------------------------

def _attn_block(vec):
    # [H, D] per-head attention vector -> [H, H*D] block-row matrix so that
    # all-head logits are a single matmul against the projected features.
    h, d = vec.shape
    w = jnp.zeros((h, h * d), jnp.float32)
    for i in range(h):
        w = w.at[i, i * d:(i + 1) * d].set(vec[i])
    return w


def init_params(key, in_channels, hidden, metadata, heads=HEADS):
    node_types, edge_types = metadata
    d = hidden // heads
    keys = iter(jax.random.split(key, 4 + 2 * len(node_types) + 2 * len(edge_types)))
    params = {'proj': {}, 'edge': {}}
    for nt in node_types:
        w = jax.random.normal(next(keys), (hidden, in_channels), jnp.float32) * 0.1
        b = jax.random.normal(next(keys), (1, hidden), jnp.float32) * 0.1
        params['proj'][nt] = (jnp.transpose(w), b)            # store W^T
    for et in edge_types:
        ls = jax.random.normal(next(keys), (heads, d), jnp.float32) * 0.1
        ld = jax.random.normal(next(keys), (heads, d), jnp.float32) * 0.1
        params['edge']['__'.join(et)] = (_attn_block(ls), _attn_block(ld))
    wk = jax.random.normal(next(keys), (hidden, hidden), jnp.float32) * 0.1
    bk = jax.random.normal(next(keys), (1, hidden), jnp.float32) * 0.1
    params['k_lin'] = (jnp.transpose(wk), bk)
    params['q'] = jax.random.normal(next(keys), (1, hidden), jnp.float32) * 0.1
    params['bn'] = (jnp.ones((1, hidden), jnp.float32),
                    jnp.zeros((1, hidden), jnp.float32))
    return params


# ------------------------------ model forward --------------------------------

def han_forward(params, x_dict, edge_index_dict, heads=HEADS):
    out_lists = {nt: [] for nt in x_dict}

    # fused projection + per-edge-type multi-head attention + sum agg + ReLU
    for et, edge_index in edge_index_dict.items():
        src_t, _, dst_t = et
        wsrc_t, bsrc = params['proj'][src_t]
        wdst_t, bdst = params['proj'][dst_t]
        asrc_blk, adst_blk = params['edge']['__'.join(et)]
        n_src, n_dst = x_dict[src_t].shape[0], x_dict[dst_t].shape[0]
        src, dst = edge_index
        # TODO(synk): dense mask deduplicates parallel edges; PyG edge-level
        # softmax would count duplicates as separate edges.
        mask = jnp.zeros((n_dst, n_src), jnp.float32).at[dst, src].set(1.0)
        out_lists[dst_t].append(
            edge_attention(x_dict[src_t], x_dict[dst_t],
                           wsrc_t, bsrc, wdst_t, bdst,
                           asrc_blk, adst_blk, mask, heads))

    # fused semantic attention across edge types + BatchNorm1d per node type
    wkt, bk = params['k_lin']
    gamma, beta = params['bn']
    out_dict = {}
    for nt, outs in out_lists.items():
        if not outs:
            out_dict[nt] = None   # matches PyG group() returning None
            continue
        flat = jnp.concatenate(outs, axis=0)                  # [T*N, F]
        out_dict[nt] = semantic_bn(flat, wkt, bk, params['q'], gamma, beta,
                                   num_rel=len(outs), n=outs[0].shape[0])
    return out_dict


def model_forward(params, x_dict, edge_index_dict, edge_label_index,
                  heads=HEADS):
    h = han_forward(params, x_dict, edge_index_dict, heads)
    # glue-side gather of edge endpoint features (pure indexing)
    er = jnp.take(h['req'], edge_label_index[0], axis=0)
    ec = jnp.take(h['code'], edge_label_index[1], axis=0)
    pred = classifier(er, ec)
    return pred, h


# ----------------------------------- main ------------------------------------

if __name__ == "__main__":
    key = jax.random.PRNGKey(0)
    in_channels, hidden = 16, 32
    n_req, n_code = 16, 16

    node_types = ['req', 'code']
    edge_types = [('req', 'link', 'code'), ('code', 'rev_link', 'req')]
    metadata = (node_types, edge_types)

    kx1, kx2, kp = jax.random.split(key, 3)
    x_dict = {
        'req': jax.random.normal(kx1, (n_req, in_channels), jnp.float32),
        'code': jax.random.normal(kx2, (n_code, in_channels), jnp.float32),
    }

    # deterministic, duplicate-free edge lists in PyG edge_index format (2, E)
    link_src = [r for r in range(n_req) for k in range(2)]
    link_dst = [(3 * r + k) % n_code for r in range(n_req) for k in range(2)]
    edge_index_dict = {
        ('req', 'link', 'code'): jnp.array([link_src, link_dst], jnp.int32),
        ('code', 'rev_link', 'req'): jnp.array([link_dst, link_src], jnp.int32),
    }

    # supervision edges for the classifier
    n_label = 8
    edge_label_index = jnp.array(
        [[i % n_req for i in range(n_label)],
         [(2 * i + 1) % n_code for i in range(n_label)]], jnp.int32)

    params = init_params(kp, in_channels, hidden, metadata, HEADS)

    fwd = jax.jit(functools.partial(model_forward, heads=HEADS))
    pred, out_dict = fwd(params, x_dict, edge_index_dict, edge_label_index)

    jax.block_until_ready(pred)
    for v in out_dict.values():
        if v is not None:
            jax.block_until_ready(v)
    print("KERNEL_OK")
</pallas_src>

<mosaic_0001>
module attributes {stable_mosaic.version = 11 : i64} {
  func.func @_edge_attn_kernel(%arg0: i32, %arg1: memref<16x16xf32, #tpu.memory_space<vmem>>, %arg2: memref<16x16xf32, #tpu.memory_space<vmem>>, %arg3: memref<16x32xf32, #tpu.memory_space<vmem>>, %arg4: memref<1x32xf32, #tpu.memory_space<vmem>>, %arg5: memref<16x32xf32, #tpu.memory_space<vmem>>, %arg6: memref<1x32xf32, #tpu.memory_space<vmem>>, %arg7: memref<8x32xf32, #tpu.memory_space<vmem>>, %arg8: memref<8x32xf32, #tpu.memory_space<vmem>>, %arg9: memref<16x16xf32, #tpu.memory_space<vmem>>, %arg10: memref<16x32xf32, #tpu.memory_space<vmem>>) attributes {dimension_semantics = [#tpu.dimension_semantics<arbitrary>], iteration_bounds = array<i64: 1>, scalar_prefetch = 0 : i64, scratch_operands = 0 : i64, tpu.core_type = #tpu.core_type<tc>, window_params = [{pipeline_mode = #tpu.pipeline_mode<synchronous>, transform_indices = @transform_0, window_bounds = array<i64: 16, 16>}, {pipeline_mode = #tpu.pipeline_mode<synchronous>, transform_indices = @transform_1, window_bounds = array<i64: 16, 16>}, {pipeline_mode = #tpu.pipeline_mode<synchronous>, transform_indices = @transform_2, window_bounds = array<i64: 16, 32>}, {pipeline_mode = #tpu.pipeline_mode<synchronous>, transform_indices = @transform_3, window_bounds = array<i64: 1, 32>}, {pipeline_mode = #tpu.pipeline_mode<synchronous>, transform_indices = @transform_4, window_bounds = array<i64: 16, 32>}, {pipeline_mode = #tpu.pipeline_mode<synchronous>, transform_indices = @transform_5, window_bounds = array<i64: 1, 32>}, {pipeline_mode = #tpu.pipeline_mode<synchronous>, transform_indices = @transform_6, window_bounds = array<i64: 8, 32>}, {pipeline_mode = #tpu.pipeline_mode<synchronous>, transform_indices = @transform_7, window_bounds = array<i64: 8, 32>}, {pipeline_mode = #tpu.pipeline_mode<synchronous>, transform_indices = @transform_8, window_bounds = array<i64: 16, 16>}, {pipeline_mode = #tpu.pipeline_mode<synchronous>, transform_indices = @transform_9, window_bounds = array<i64: 16, 32>}]} {
    %c0 = arith.constant 0 : index
    %c0_0 = arith.constant 0 : index
    %0 = vector.load %arg1[%c0, %c0_0] : memref<16x16xf32, #tpu.memory_space<vmem>>, vector<16x16xf32>
    %c0_1 = arith.constant 0 : index
    %c0_2 = arith.constant 0 : index
    %1 = vector.load %arg3[%c0_1, %c0_2] : memref<16x32xf32, #tpu.memory_space<vmem>>, vector<16x32xf32>
    %cst = arith.constant dense<0.000000e+00> : vector<16x32xf32>
    %2 = tpu.matmul %0, %1, %cst {dimension_numbers = #tpu.dot_dimension_numbers<[1], [0], [0], [1], [0, 0, 1, 1], [], []>} : vector<16x16xf32>, vector<16x32xf32>, vector<16x32xf32> -> vector<16x32xf32>
    %c0_3 = arith.constant 0 : index
    %c0_4 = arith.constant 0 : index
    %3 = vector.load %arg4[%c0_3, %c0_4] : memref<1x32xf32, #tpu.memory_space<vmem>>, vector<1x32xf32>
    %4 = vector.broadcast %3 : vector<1x32xf32> to vector<16x32xf32>
    %5 = arith.addf %2, %4 : vector<16x32xf32>
    %c0_5 = arith.constant 0 : index
    %c0_6 = arith.constant 0 : index
    %6 = vector.load %arg2[%c0_5, %c0_6] : memref<16x16xf32, #tpu.memory_space<vmem>>, vector<16x16xf32>
    %c0_7 = arith.constant 0 : index
    %c0_8 = arith.constant 0 : index
    %7 = vector.load %arg5[%c0_7, %c0_8] : memref<16x32xf32, #tpu.memory_space<vmem>>, vector<16x32xf32>
    %cst_9 = arith.constant dense<0.000000e+00> : vector<16x32xf32>
    %8 = tpu.matmul %6, %7, %cst_9 {dimension_numbers = #tpu.dot_dimension_numbers<[1], [0], [0], [1], [0, 0, 1, 1], [], []>} : vector<16x16xf32>, vector<16x32xf32>, vector<16x32xf32> -> vector<16x32xf32>
    %c0_10 = arith.constant 0 : index
    %c0_11 = arith.constant 0 : index
    %9 = vector.load %arg6[%c0_10, %c0_11] : memref<1x32xf32, #tpu.memory_space<vmem>>, vector<1x32xf32>
    %10 = vector.broadcast %9 : vector<1x32xf32> to vector<16x32xf32>
    %11 = arith.addf %8, %10 : vector<16x32xf32>
    %c0_12 = arith.constant 0 : index
    %c0_13 = arith.constant 0 : index
    %12 = vector.load %arg7[%c0_12, %c0_13] : memref<8x32xf32, #tpu.memory_space<vmem>>, vector<8x32xf32>
    %cst_14 = arith.constant dense<0.000000e+00> : vector<8x16xf32>
    %13 = tpu.matmul %12, %5, %cst_14 {dimension_numbers = #tpu.dot_dimension_numbers<[1], [1], [0], [0], [0, 0, 1, 0], [], []>} : vector<8x32xf32>, vector<16x32xf32>, vector<8x16xf32> -> vector<8x16xf32>
    %c0_15 = arith.constant 0 : index
    %c0_16 = arith.constant 0 : index
    %14 = vector.load %arg8[%c0_15, %c0_16] : memref<8x32xf32, #tpu.memory_space<vmem>>, vector<8x32xf32>
    %cst_17 = arith.constant dense<0.000000e+00> : vector<16x8xf32>
    %15 = tpu.matmul %11, %14, %cst_17 {dimension_numbers = #tpu.dot_dimension_numbers<[1], [1], [0], [0], [0, 0, 1, 0], [], []>} : vector<16x32xf32>, vector<8x32xf32>, vector<16x8xf32> -> vector<16x8xf32>
    %c0_18 = arith.constant 0 : index
    %c0_19 = arith.constant 0 : index
    %16 = vector.load %arg9[%c0_18, %c0_19] : memref<16x16xf32, #tpu.memory_space<vmem>>, vector<16x16xf32>
    %cst_20 = arith.constant 5.000000e-01 : f32
    %17 = vector.broadcast %cst_20 : f32 to vector<16x16xf32>
    %18 = arith.cmpf ogt, %16, %17 : vector<16x16xf32>
    %19 = vector.extract_strided_slice %15 {offsets = [0, 0], sizes = [16, 1], strides = [1, 1]} : vector<16x8xf32> to vector<16x1xf32>
    %20 = vector.extract_strided_slice %13 {offsets = [0, 0], sizes = [1, 16], strides = [1, 1]} : vector<8x16xf32> to vector<1x16xf32>
    %21 = vector.broadcast %19 : vector<16x1xf32> to vector<16x16xf32>
    %22 = vector.broadcast %20 : vector<1x16xf32> to vector<16x16xf32>
    %23 = arith.addf %21, %22 : vector<16x16xf32>
    %cst_21 = arith.constant 0.000000e+00 : f32
    %24 = vector.broadcast %cst_21 : f32 to vector<16x16xf32>
    %25 = arith.cmpf oge, %23, %24 : vector<16x16xf32>
    %cst_22 = arith.constant 2.000000e-01 : f32
    %26 = vector.broadcast %cst_22 : f32 to vector<16x16xf32>
    %27 = arith.mulf %26, %23 : vector<16x16xf32>
    %28 = arith.select %25, %23, %27 : vector<16x16xi1>, vector<16x16xf32>
    %cst_23 = arith.constant -1.000000e+30 : f32
    %29 = vector.broadcast %cst_23 : f32 to vector<16x16xf32>
    %30 = arith.select %18, %28, %29 : vector<16x16xi1>, vector<16x16xf32>
    %cst_24 = arith.constant dense<0xFF800000> : vector<16xf32>
    %31 = vector.multi_reduction <maximumf>, %30, %cst_24 [1] : vector<16x16xf32> to vector<16xf32>
    %32 = vector.shape_cast %31 : vector<16xf32> to vector<16x1xf32>
    %33 = vector.broadcast %32 : vector<16x1xf32> to vector<16x16xf32>
    %34 = arith.subf %30, %33 : vector<16x16xf32>
    %35 = math.exp %34 : vector<16x16xf32>
    %cst_25 = arith.constant 0.000000e+00 : f32
    %36 = vector.broadcast %cst_25 : f32 to vector<16x16xf32>
    %37 = arith.select %18, %35, %36 : vector<16x16xi1>, vector<16x16xf32>
    %cst_26 = arith.constant dense<0.000000e+00> : vector<16xf32>
    %38 = vector.multi_reduction <add>, %37, %cst_26 [1] : vector<16x16xf32> to vector<16xf32>
    %39 = vector.shape_cast %38 : vector<16xf32> to vector<16x1xf32>
    %cst_27 = arith.constant 1.000000e-30 : f32
    %40 = vector.broadcast %cst_27 : f32 to vector<16x1xf32>
    %41 = arith.maximumf %39, %40 : vector<16x1xf32>
    %42 = tpu.reciprocal %41 {approx = true} : vector<16x1xf32> -> vector<16x1xf32>
    %43 = vector.broadcast %42 : vector<16x1xf32> to vector<16x16xf32>
    %44 = arith.mulf %37, %43 : vector<16x16xf32>
    %45 = vector.extract_strided_slice %5 {offsets = [0, 0], sizes = [16, 4], strides = [1, 1]} : vector<16x32xf32> to vector<16x4xf32>
    %cst_28 = arith.constant dense<0.000000e+00> : vector<16x4xf32>
    %46 = tpu.matmul %44, %45, %cst_28 {dimension_numbers = #tpu.dot_dimension_numbers<[1], [0], [0], [1], [0, 0, 1, 1], [], []>} : vector<16x16xf32>, vector<16x4xf32>, vector<16x4xf32> -> vector<16x4xf32>
    %47 = vector.extract_strided_slice %15 {offsets = [0, 1], sizes = [16, 1], strides = [1, 1]} : vector<16x8xf32> to vector<16x1xf32>
    %48 = vector.extract_strided_slice %13 {offsets = [1, 0], sizes = [1, 16], strides = [1, 1]} : vector<8x16xf32> to vector<1x16xf32>
    %49 = vector.broadcast %47 : vector<16x1xf32> to vector<16x16xf32>
    %50 = vector.broadcast %48 : vector<1x16xf32> to vector<16x16xf32>
    %51 = arith.addf %49, %50 : vector<16x16xf32>
    %cst_29 = arith.constant 0.000000e+00 : f32
    %52 = vector.broadcast %cst_29 : f32 to vector<16x16xf32>
    %53 = arith.cmpf oge, %51, %52 : vector<16x16xf32>
    %cst_30 = arith.constant 2.000000e-01 : f32
    %54 = vector.broadcast %cst_30 : f32 to vector<16x16xf32>
    %55 = arith.mulf %54, %51 : vector<16x16xf32>
    %56 = arith.select %53, %51, %55 : vector<16x16xi1>, vector<16x16xf32>
    %cst_31 = arith.constant -1.000000e+30 : f32
    %57 = vector.broadcast %cst_31 : f32 to vector<16x16xf32>
    %58 = arith.select %18, %56, %57 : vector<16x16xi1>, vector<16x16xf32>
    %cst_32 = arith.constant dense<0xFF800000> : vector<16xf32>
    %59 = vector.multi_reduction <maximumf>, %58, %cst_32 [1] : vector<16x16xf32> to vector<16xf32>
    %60 = vector.shape_cast %59 : vector<16xf32> to vector<16x1xf32>
    %61 = vector.broadcast %60 : vector<16x1xf32> to vector<16x16xf32>
    %62 = arith.subf %58, %61 : vector<16x16xf32>
    %63 = math.exp %62 : vector<16x16xf32>
    %cst_33 = arith.constant 0.000000e+00 : f32
    %64 = vector.broadcast %cst_33 : f32 to vector<16x16xf32>
    %65 = arith.select %18, %63, %64 : vector<16x16xi1>, vector<16x16xf32>
    %cst_34 = arith.constant dense<0.000000e+00> : vector<16xf32>
    %66 = vector.multi_reduction <add>, %65, %cst_34 [1] : vector<16x16xf32> to vector<16xf32>
    %67 = vector.shape_cast %66 : vector<16xf32> to vector<16x1xf32>
    %cst_35 = arith.constant 1.000000e-30 : f32
    %68 = vector.broadcast %cst_35 : f32 to vector<16x1xf32>
    %69 = arith.maximumf %67, %68 : vector<16x1xf32>
    %70 = tpu.reciprocal %69 {approx = true} : vector<16x1xf32> -> vector<16x1xf32>
    %71 = vector.broadcast %70 : vector<16x1xf32> to vector<16x16xf32>
    %72 = arith.mulf %65, %71 : vector<16x16xf32>
    %73 = vector.extract_strided_slice %5 {offsets = [0, 4], sizes = [16, 4], strides = [1, 1]} : vector<16x32xf32> to vector<16x4xf32>
    %cst_36 = arith.constant dense<0.000000e+00> : vector<16x4xf32>
    %74 = tpu.matmul %72, %73, %cst_36 {dimension_numbers = #tpu.dot_dimension_numbers<[1], [0], [0], [1], [0, 0, 1, 1], [], []>} : vector<16x16xf32>, vector<16x4xf32>, vector<16x4xf32> -> vector<16x4xf32>
    %75 = vector.extract_strided_slice %15 {offsets = [0, 2], sizes = [16, 1], strides = [1, 1]} : vector<16x8xf32> to vector<16x1xf32>
    %76 = vector.extract_strided_slice %13 {offsets = [2, 0], sizes = [1, 16], strides = [1, 1]} : vector<8x16xf32> to vector<1x16xf32>
    %77 = vector.broadcast %75 : vector<16x1xf32> to vector<16x16xf32>
    %78 = vector.broadcast %76 : vector<1x16xf32> to vector<16x16xf32>
    %79 = arith.addf %77, %78 : vector<16x16xf32>
    %cst_37 = arith.constant 0.000000e+00 : f32
    %80 = vector.broadcast %cst_37 : f32 to vector<16x16xf32>
    %81 = arith.cmpf oge, %79, %80 : vector<16x16xf32>
    %cst_38 = arith.constant 2.000000e-01 : f32
    %82 = vector.broadcast %cst_38 : f32 to vector<16x16xf32>
    %83 = arith.mulf %82, %79 : vector<16x16xf32>
    %84 = arith.select %81, %79, %83 : vector<16x16xi1>, vector<16x16xf32>
    %cst_39 = arith.constant -1.000000e+30 : f32
    %85 = vector.broadcast %cst_39 : f32 to vector<16x16xf32>
    %86 = arith.select %18, %84, %85 : vector<16x16xi1>, vector<16x16xf32>
    %cst_40 = arith.constant dense<0xFF800000> : vector<16xf32>
    %87 = vector.multi_reduction <maximumf>, %86, %cst_40 [1] : vector<16x16xf32> to vector<16xf32>
    %88 = vector.shape_cast %87 : vector<16xf32> to vector<16x1xf32>
    %89 = vector.broadcast %88 : vector<16x1xf32> to vector<16x16xf32>
    %90 = arith.subf %86, %89 : vector<16x16xf32>
    %91 = math.exp %90 : vector<16x16xf32>
    %cst_41 = arith.constant 0.000000e+00 : f32
    %92 = vector.broadcast %cst_41 : f32 to vector<16x16xf32>
    %93 = arith.select %18, %91, %92 : vector<16x16xi1>, vector<16x16xf32>
    %cst_42 = arith.constant dense<0.000000e+00> : vector<16xf32>
    %94 = vector.multi_reduction <add>, %93, %cst_42 [1] : vector<16x16xf32> to vector<16xf32>
    %95 = vector.shape_cast %94 : vector<16xf32> to vector<16x1xf32>
    %cst_43 = arith.constant 1.000000e-30 : f32
    %96 = vector.broadcast %cst_43 : f32 to vector<16x1xf32>
    %97 = arith.maximumf %95, %96 : vector<16x1xf32>
    %98 = tpu.reciprocal %97 {approx = true} : vector<16x1xf32> -> vector<16x1xf32>
    %99 = vector.broadcast %98 : vector<16x1xf32> to vector<16x16xf32>
    %100 = arith.mulf %93, %99 : vector<16x16xf32>
    %101 = vector.extract_strided_slice %5 {offsets = [0, 8], sizes = [16, 4], strides = [1, 1]} : vector<16x32xf32> to vector<16x4xf32>
    %cst_44 = arith.constant dense<0.000000e+00> : vector<16x4xf32>
    %102 = tpu.matmul %100, %101, %cst_44 {dimension_numbers = #tpu.dot_dimension_numbers<[1], [0], [0], [1], [0, 0, 1, 1], [], []>} : vector<16x16xf32>, vector<16x4xf32>, vector<16x4xf32> -> vector<16x4xf32>
    %103 = vector.extract_strided_slice %15 {offsets = [0, 3], sizes = [16, 1], strides = [1, 1]} : vector<16x8xf32> to vector<16x1xf32>
    %104 = vector.extract_strided_slice %13 {offsets = [3, 0], sizes = [1, 16], strides = [1, 1]} : vector<8x16xf32> to vector<1x16xf32>
    %105 = vector.broadcast %103 : vector<16x1xf32> to vector<16x16xf32>
    %106 = vector.broadcast %104 : vector<1x16xf32> to vector<16x16xf32>
    %107 = arith.addf %105, %106 : vector<16x16xf32>
    %cst_45 = arith.constant 0.000000e+00 : f32
    %108 = vector.broadcast %cst_45 : f32 to vector<16x16xf32>
    %109 = arith.cmpf oge, %107, %108 : vector<16x16xf32>
    %cst_46 = arith.constant 2.000000e-01 : f32
    %110 = vector.broadcast %cst_46 : f32 to vector<16x16xf32>
    %111 = arith.mulf %110, %107 : vector<16x16xf32>
    %112 = arith.select %109, %107, %111 : vector<16x16xi1>, vector<16x16xf32>
    %cst_47 = arith.constant -1.000000e+30 : f32
    %113 = vector.broadcast %cst_47 : f32 to vector<16x16xf32>
    %114 = arith.select %18, %112, %113 : vector<16x16xi1>, vector<16x16xf32>
    %cst_48 = arith.constant dense<0xFF800000> : vector<16xf32>
    %115 = vector.multi_reduction <maximumf>, %114, %cst_48 [1] : vector<16x16xf32> to vector<16xf32>
    %116 = vector.shape_cast %115 : vector<16xf32> to vector<16x1xf32>
    %117 = vector.broadcast %116 : vector<16x1xf32> to vector<16x16xf32>
    %118 = arith.subf %114, %117 : vector<16x16xf32>
    %119 = math.exp %118 : vector<16x16xf32>
    %cst_49 = arith.constant 0.000000e+00 : f32
    %120 = vector.broadcast %cst_49 : f32 to vector<16x16xf32>
    %121 = arith.select %18, %119, %120 : vector<16x16xi1>, vector<16x16xf32>
    %cst_50 = arith.constant dense<0.000000e+00> : vector<16xf32>
    %122 = vector.multi_reduction <add>, %121, %cst_50 [1] : vector<16x16xf32> to vector<16xf32>
    %123 = vector.shape_cast %122 : vector<16xf32> to vector<16x1xf32>
    %cst_51 = arith.constant 1.000000e-30 : f32
    %124 = vector.broadcast %cst_51 : f32 to vector<16x1xf32>
    %125 = arith.maximumf %123, %124 : vector<16x1xf32>
    %126 = tpu.reciprocal %125 {approx = true} : vector<16x1xf32> -> vector<16x1xf32>
    %127 = vector.broadcast %126 : vector<16x1xf32> to vector<16x16xf32>
    %128 = arith.mulf %121, %127 : vector<16x16xf32>
    %129 = vector.extract_strided_slice %5 {offsets = [0, 12], sizes = [16, 4], strides = [1, 1]} : vector<16x32xf32> to vector<16x4xf32>
    %cst_52 = arith.constant dense<0.000000e+00> : vector<16x4xf32>
    %130 = tpu.matmul %128, %129, %cst_52 {dimension_numbers = #tpu.dot_dimension_numbers<[1], [0], [0], [1], [0, 0, 1, 1], [], []>} : vector<16x16xf32>, vector<16x4xf32>, vector<16x4xf32> -> vector<16x4xf32>
    %131 = vector.extract_strided_slice %15 {offsets = [0, 4], sizes = [16, 1], strides = [1, 1]} : vector<16x8xf32> to vector<16x1xf32>
    %132 = vector.extract_strided_slice %13 {offsets = [4, 0], sizes = [1, 16], strides = [1, 1]} : vector<8x16xf32> to vector<1x16xf32>
    %133 = vector.broadcast %131 : vector<16x1xf32> to vector<16x16xf32>
    %134 = vector.broadcast %132 : vector<1x16xf32> to vector<16x16xf32>
    %135 = arith.addf %133, %134 : vector<16x16xf32>
    %cst_53 = arith.constant 0.000000e+00 : f32
    %136 = vector.broadcast %cst_53 : f32 to vector<16x16xf32>
    %137 = arith.cmpf oge, %135, %136 : vector<16x16xf32>
    %cst_54 = arith.constant 2.000000e-01 : f32
    %138 = vector.broadcast %cst_54 : f32 to vector<16x16xf32>
    %139 = arith.mulf %138, %135 : vector<16x16xf32>
    %140 = arith.select %137, %135, %139 : vector<16x16xi1>, vector<16x16xf32>
    %cst_55 = arith.constant -1.000000e+30 : f32
    %141 = vector.broadcast %cst_55 : f32 to vector<16x16xf32>
    %142 = arith.select %18, %140, %141 : vector<16x16xi1>, vector<16x16xf32>
    %cst_56 = arith.constant dense<0xFF800000> : vector<16xf32>
    %143 = vector.multi_reduction <maximumf>, %142, %cst_56 [1] : vector<16x16xf32> to vector<16xf32>
    %144 = vector.shape_cast %143 : vector<16xf32> to vector<16x1xf32>
    %145 = vector.broadcast %144 : vector<16x1xf32> to vector<16x16xf32>
    %146 = arith.subf %142, %145 : vector<16x16xf32>
    %147 = math.exp %146 : vector<16x16xf32>
    %cst_57 = arith.constant 0.000000e+00 : f32
    %148 = vector.broadcast %cst_57 : f32 to vector<16x16xf32>
    %149 = arith.select %18, %147, %148 : vector<16x16xi1>, vector<16x16xf32>
    %cst_58 = arith.constant dense<0.000000e+00> : vector<16xf32>
    %150 = vector.multi_reduction <add>, %149, %cst_58 [1] : vector<16x16xf32> to vector<16xf32>
    %151 = vector.shape_cast %150 : vector<16xf32> to vector<16x1xf32>
    %cst_59 = arith.constant 1.000000e-30 : f32
    %152 = vector.broadcast %cst_59 : f32 to vector<16x1xf32>
    %153 = arith.maximumf %151, %152 : vector<16x1xf32>
    %154 = tpu.reciprocal %153 {approx = true} : vector<16x1xf32> -> vector<16x1xf32>
    %155 = vector.broadcast %154 : vector<16x1xf32> to vector<16x16xf32>
    %156 = arith.mulf %149, %155 : vector<16x16xf32>
    %157 = vector.extract_strided_slice %5 {offsets = [0, 16], sizes = [16, 4], strides = [1, 1]} : vector<16x32xf32> to vector<16x4xf32>
    %cst_60 = arith.constant dense<0.000000e+00> : vector<16x4xf32>
    %158 = tpu.matmul %156, %157, %cst_60 {dimension_numbers = #tpu.dot_dimension_numbers<[1], [0], [0], [1], [0, 0, 1, 1], [], []>} : vector<16x16xf32>, vector<16x4xf32>, vector<16x4xf32> -> vector<16x4xf32>
    %159 = vector.extract_strided_slice %15 {offsets = [0, 5], sizes = [16, 1], strides = [1, 1]} : vector<16x8xf32> to vector<16x1xf32>
    %160 = vector.extract_strided_slice %13 {offsets = [5, 0], sizes = [1, 16], strides = [1, 1]} : vector<8x16xf32> to vector<1x16xf32>
    %161 = vector.broadcast %159 : vector<16x1xf32> to vector<16x16xf32>
    %162 = vector.broadcast %160 : vector<1x16xf32> to vector<16x16xf32>
    %163 = arith.addf %161, %162 : vector<16x16xf32>
    %cst_61 = arith.constant 0.000000e+00 : f32
    %164 = vector.broadcast %cst_61 : f32 to vector<16x16xf32>
    %165 = arith.cmpf oge, %163, %164 : vector<16x16xf32>
    %cst_62 = arith.constant 2.000000e-01 : f32
    %166 = vector.broadcast %cst_62 : f32 to vector<16x16xf32>
    %167 = arith.mulf %166, %163 : vector<16x16xf32>
    %168 = arith.select %165, %163, %167 : vector<16x16xi1>, vector<16x16xf32>
    %cst_63 = arith.constant -1.000000e+30 : f32
    %169 = vector.broadcast %cst_63 : f32 to vector<16x16xf32>
    %170 = arith.select %18, %168, %169 : vector<16x16xi1>, vector<16x16xf32>
    %cst_64 = arith.constant dense<0xFF800000> : vector<16xf32>
    %171 = vector.multi_reduction <maximumf>, %170, %cst_64 [1] : vector<16x16xf32> to vector<16xf32>
    %172 = vector.shape_cast %171 : vector<16xf32> to vector<16x1xf32>
    %173 = vector.broadcast %172 : vector<16x1xf32> to vector<16x16xf32>
    %174 = arith.subf %170, %173 : vector<16x16xf32>
    %175 = math.exp %174 : vector<16x16xf32>
    %cst_65 = arith.constant 0.000000e+00 : f32
    %176 = vector.broadcast %cst_65 : f32 to vector<16x16xf32>
    %177 = arith.select %18, %175, %176 : vector<16x16xi1>, vector<16x16xf32>
    %cst_66 = arith.constant dense<0.000000e+00> : vector<16xf32>
    %178 = vector.multi_reduction <add>, %177, %cst_66 [1] : vector<16x16xf32> to vector<16xf32>
    %179 = vector.shape_cast %178 : vector<16xf32> to vector<16x1xf32>
    %cst_67 = arith.constant 1.000000e-30 : f32
    %180 = vector.broadcast %cst_67 : f32 to vector<16x1xf32>
    %181 = arith.maximumf %179, %180 : vector<16x1xf32>
    %182 = tpu.reciprocal %181 {approx = true} : vector<16x1xf32> -> vector<16x1xf32>
    %183 = vector.broadcast %182 : vector<16x1xf32> to vector<16x16xf32>
    %184 = arith.mulf %177, %183 : vector<16x16xf32>
    %185 = vector.extract_strided_slice %5 {offsets = [0, 20], sizes = [16, 4], strides = [1, 1]} : vector<16x32xf32> to vector<16x4xf32>
    %cst_68 = arith.constant dense<0.000000e+00> : vector<16x4xf32>
    %186 = tpu.matmul %184, %185, %cst_68 {dimension_numbers = #tpu.dot_dimension_numbers<[1], [0], [0], [1], [0, 0, 1, 1], [], []>} : vector<16x16xf32>, vector<16x4xf32>, vector<16x4xf32> -> vector<16x4xf32>
    %187 = vector.extract_strided_slice %15 {offsets = [0, 6], sizes = [16, 1], strides = [1, 1]} : vector<16x8xf32> to vector<16x1xf32>
    %188 = vector.extract_strided_slice %13 {offsets = [6, 0], sizes = [1, 16], strides = [1, 1]} : vector<8x16xf32> to vector<1x16xf32>
    %189 = vector.broadcast %187 : vector<16x1xf32> to vector<16x16xf32>
    %190 = vector.broadcast %188 : vector<1x16xf32> to vector<16x16xf32>
    %191 = arith.addf %189, %190 : vector<16x16xf32>
    %cst_69 = arith.constant 0.000000e+00 : f32
    %192 = vector.broadcast %cst_69 : f32 to vector<16x16xf32>
    %193 = arith.cmpf oge, %191, %192 : vector<16x16xf32>
    %cst_70 = arith.constant 2.000000e-01 : f32
    %194 = vector.broadcast %cst_70 : f32 to vector<16x16xf32>
    %195 = arith.mulf %194, %191 : vector<16x16xf32>
    %196 = arith.select %193, %191, %195 : vector<16x16xi1>, vector<16x16xf32>
    %cst_71 = arith.constant -1.000000e+30 : f32
    %197 = vector.broadcast %cst_71 : f32 to vector<16x16xf32>
    %198 = arith.select %18, %196, %197 : vector<16x16xi1>, vector<16x16xf32>
    %cst_72 = arith.constant dense<0xFF800000> : vector<16xf32>
    %199 = vector.multi_reduction <maximumf>, %198, %cst_72 [1] : vector<16x16xf32> to vector<16xf32>
    %200 = vector.shape_cast %199 : vector<16xf32> to vector<16x1xf32>
    %201 = vector.broadcast %200 : vector<16x1xf32> to vector<16x16xf32>
    %202 = arith.subf %198, %201 : vector<16x16xf32>
    %203 = math.exp %202 : vector<16x16xf32>
    %cst_73 = arith.constant 0.000000e+00 : f32
    %204 = vector.broadcast %cst_73 : f32 to vector<16x16xf32>
    %205 = arith.select %18, %203, %204 : vector<16x16xi1>, vector<16x16xf32>
    %cst_74 = arith.constant dense<0.000000e+00> : vector<16xf32>
    %206 = vector.multi_reduction <add>, %205, %cst_74 [1] : vector<16x16xf32> to vector<16xf32>
    %207 = vector.shape_cast %206 : vector<16xf32> to vector<16x1xf32>
    %cst_75 = arith.constant 1.000000e-30 : f32
    %208 = vector.broadcast %cst_75 : f32 to vector<16x1xf32>
    %209 = arith.maximumf %207, %208 : vector<16x1xf32>
    %210 = tpu.reciprocal %209 {approx = true} : vector<16x1xf32> -> vector<16x1xf32>
    %211 = vector.broadcast %210 : vector<16x1xf32> to vector<16x16xf32>
    %212 = arith.mulf %205, %211 : vector<16x16xf32>
    %213 = vector.extract_strided_slice %5 {offsets = [0, 24], sizes = [16, 4], strides = [1, 1]} : vector<16x32xf32> to vector<16x4xf32>
    %cst_76 = arith.constant dense<0.000000e+00> : vector<16x4xf32>
    %214 = tpu.matmul %212, %213, %cst_76 {dimension_numbers = #tpu.dot_dimension_numbers<[1], [0], [0], [1], [0, 0, 1, 1], [], []>} : vector<16x16xf32>, vector<16x4xf32>, vector<16x4xf32> -> vector<16x4xf32>
    %215 = vector.extract_strided_slice %15 {offsets = [0, 7], sizes = [16, 1], strides = [1, 1]} : vector<16x8xf32> to vector<16x1xf32>
    %216 = vector.extract_strided_slice %13 {offsets = [7, 0], sizes = [1, 16], strides = [1, 1]} : vector<8x16xf32> to vector<1x16xf32>
    %217 = vector.broadcast %215 : vector<16x1xf32> to vector<16x16xf32>
    %218 = vector.broadcast %216 : vector<1x16xf32> to vector<16x16xf32>
    %219 = arith.addf %217, %218 : vector<16x16xf32>
    %cst_77 = arith.constant 0.000000e+00 : f32
    %220 = vector.broadcast %cst_77 : f32 to vector<16x16xf32>
    %221 = arith.cmpf oge, %219, %220 : vector<16x16xf32>
    %cst_78 = arith.constant 2.000000e-01 : f32
    %222 = vector.broadcast %cst_78 : f32 to vector<16x16xf32>
    %223 = arith.mulf %222, %219 : vector<16x16xf32>
    %224 = arith.select %221, %219, %223 : vector<16x16xi1>, vector<16x16xf32>
    %cst_79 = arith.constant -1.000000e+30 : f32
    %225 = vector.broadcast %cst_79 : f32 to vector<16x16xf32>
    %226 = arith.select %18, %224, %225 : vector<16x16xi1>, vector<16x16xf32>
    %cst_80 = arith.constant dense<0xFF800000> : vector<16xf32>
    %227 = vector.multi_reduction <maximumf>, %226, %cst_80 [1] : vector<16x16xf32> to vector<16xf32>
    %228 = vector.shape_cast %227 : vector<16xf32> to vector<16x1xf32>
    %229 = vector.broadcast %228 : vector<16x1xf32> to vector<16x16xf32>
    %230 = arith.subf %226, %229 : vector<16x16xf32>
    %231 = math.exp %230 : vector<16x16xf32>
    %cst_81 = arith.constant 0.000000e+00 : f32
    %232 = vector.broadcast %cst_81 : f32 to vector<16x16xf32>
    %233 = arith.select %18, %231, %232 : vector<16x16xi1>, vector<16x16xf32>
    %cst_82 = arith.constant dense<0.000000e+00> : vector<16xf32>
    %234 = vector.multi_reduction <add>, %233, %cst_82 [1] : vector<16x16xf32> to vector<16xf32>
    %235 = vector.shape_cast %234 : vector<16xf32> to vector<16x1xf32>
    %cst_83 = arith.constant 1.000000e-30 : f32
    %236 = vector.broadcast %cst_83 : f32 to vector<16x1xf32>
    %237 = arith.maximumf %235, %236 : vector<16x1xf32>
    %238 = tpu.reciprocal %237 {approx = true} : vector<16x1xf32> -> vector<16x1xf32>
    %239 = vector.broadcast %238 : vector<16x1xf32> to vector<16x16xf32>
    %240 = arith.mulf %233, %239 : vector<16x16xf32>
    %241 = vector.extract_strided_slice %5 {offsets = [0, 28], sizes = [16, 4], strides = [1, 1]} : vector<16x32xf32> to vector<16x4xf32>
    %cst_84 = arith.constant dense<0.000000e+00> : vector<16x4xf32>
    %242 = tpu.matmul %240, %241, %cst_84 {dimension_numbers = #tpu.dot_dimension_numbers<[1], [0], [0], [1], [0, 0, 1, 1], [], []>} : vector<16x16xf32>, vector<16x4xf32>, vector<16x4xf32> -> vector<16x4xf32>
    %243 = tpu.concatenate %46, %74, %102, %130, %158, %186, %214, %242 in 1 : vector<16x4xf32>, vector<16x4xf32>, vector<16x4xf32>, vector<16x4xf32>, vector<16x4xf32>, vector<16x4xf32>, vector<16x4xf32>, vector<16x4xf32> -> vector<16x32xf32>
    %cst_85 = arith.constant 0.000000e+00 : f32
    %244 = vector.broadcast %cst_85 : f32 to vector<16x32xf32>
    %245 = arith.maximumf %243, %244 : vector<16x32xf32>
    %c0_86 = arith.constant 0 : index
    %c0_87 = arith.constant 0 : index
    %246 = vector.load %arg10[%c0_86, %c0_87] : memref<16x32xf32, #tpu.memory_space<vmem>>, vector<16x32xf32>
    tpu.vector_store %arg10[%c0_86, %c0_87], %245 {strides = array<i32>} : memref<16x32xf32, #tpu.memory_space<vmem>>, vector<16x32xf32>,
    return
  }
  func.func @transform_0(%arg0: i32) -> (i32, i32) {
    %c0_i32 = arith.constant 0 : i32
    %c0_i32_0 = arith.constant 0 : i32
    %c0_i32_1 = arith.constant 0 : i32
    return %c0_i32, %c0_i32_0 : i32, i32
  }
  func.func @transform_1(%arg0: i32) -> (i32, i32) {
    %c0_i32 = arith.constant 0 : i32
    %c0_i32_0 = arith.constant 0 : i32
    %c0_i32_1 = arith.constant 0 : i32
    return %c0_i32, %c0_i32_0 : i32, i32
  }
  func.func @transform_2(%arg0: i32) -> (i32, i32) {
    %c0_i32 = arith.constant 0 : i32
    %c0_i32_0 = arith.constant 0 : i32
    %c0_i32_1 = arith.constant 0 : i32
    return %c0_i32, %c0_i32_0 : i32, i32
  }
  func.func @transform_3(%arg0: i32) -> (i32, i32) {
    %c0_i32 = arith.constant 0 : i32
    %c0_i32_0 = arith.constant 0 : i32
    %c0_i32_1 = arith.constant 0 : i32
    return %c0_i32, %c0_i32_0 : i32, i32
  }
  func.func @transform_4(%arg0: i32) -> (i32, i32) {
    %c0_i32 = arith.constant 0 : i32
    %c0_i32_0 = arith.constant 0 : i32
    %c0_i32_1 = arith.constant 0 : i32
    return %c0_i32, %c0_i32_0 : i32, i32
  }
  func.func @transform_5(%arg0: i32) -> (i32, i32) {
    %c0_i32 = arith.constant 0 : i32
    %c0_i32_0 = arith.constant 0 : i32
    %c0_i32_1 = arith.constant 0 : i32
    return %c0_i32, %c0_i32_0 : i32, i32
  }
  func.func @transform_6(%arg0: i32) -> (i32, i32) {
    %c0_i32 = arith.constant 0 : i32
    %c0_i32_0 = arith.constant 0 : i32
    %c0_i32_1 = arith.constant 0 : i32
    return %c0_i32, %c0_i32_0 : i32, i32
  }
  func.func @transform_7(%arg0: i32) -> (i32, i32) {
    %c0_i32 = arith.constant 0 : i32
    %c0_i32_0 = arith.constant 0 : i32
    %c0_i32_1 = arith.constant 0 : i32
    return %c0_i32, %c0_i32_0 : i32, i32
  }
  func.func @transform_8(%arg0: i32) -> (i32, i32) {
    %c0_i32 = arith.constant 0 : i32
    %c0_i32_0 = arith.constant 0 : i32
    %c0_i32_1 = arith.constant 0 : i32
    return %c0_i32, %c0_i32_0 : i32, i32
  }
  func.func @transform_9(%arg0: i32) -> (i32, i32) {
    %c0_i32 = arith.constant 0 : i32
    %c0_i32_0 = arith.constant 0 : i32
    %c0_i32_1 = arith.constant 0 : i32
    return %c0_i32, %c0_i32_0 : i32, i32
  }
}

module attributes {stable_mosaic.version = 11 : i64} {
  func.func @_semantic_bn_kernel(%arg0: i32, %arg1: memref<16x32xf32, #tpu.memory_space<vmem>>, %arg2: memref<32x32xf32, #tpu.memory_space<vmem>>, %arg3: memref<1x32xf32, #tpu.memory_space<vmem>>, %arg4: memref<1x32xf32, #tpu.memory_space<vmem>>, %arg5: memref<1x32xf32, #tpu.memory_space<vmem>>, %arg6: memref<1x32xf32, #tpu.memory_space<vmem>>, %arg7: memref<16x32xf32, #tpu.memory_space<vmem>>) attributes {dimension_semantics = [#tpu.dimension_semantics<arbitrary>], iteration_bounds = array<i64: 1>, scalar_prefetch = 0 : i64, scratch_operands = 0 : i64, tpu.core_type = #tpu.core_type<tc>, window_params = [{pipeline_mode = #tpu.pipeline_mode<synchronous>, transform_indices = @transform_0, window_bounds = array<i64: 16, 32>}, {pipeline_mode = #tpu.pipeline_mode<synchronous>, transform_indices = @transform_1, window_bounds = array<i64: 32, 32>}, {pipeline_mode = #tpu.pipeline_mode<synchronous>, transform_indices = @transform_2, window_bounds = array<i64: 1, 32>}, {pipeline_mode = #tpu.pipeline_mode<synchronous>, transform_indices = @transform_3, window_bounds = array<i64: 1, 32>}, {pipeline_mode = #tpu.pipeline_mode<synchronous>, transform_indices = @transform_4, window_bounds = array<i64: 1, 32>}, {pipeline_mode = #tpu.pipeline_mode<synchronous>, transform_indices = @transform_5, window_bounds = array<i64: 1, 32>}, {pipeline_mode = #tpu.pipeline_mode<synchronous>, transform_indices = @transform_6, window_bounds = array<i64: 16, 32>}]} {
    %c0 = arith.constant 0 : index
    %c0_0 = arith.constant 0 : index
    %0 = vector.load %arg1[%c0, %c0_0] : memref<16x32xf32, #tpu.memory_space<vmem>>, vector<16x32xf32>
    %c0_1 = arith.constant 0 : index
    %c0_2 = arith.constant 0 : index
    %1 = vector.load %arg2[%c0_1, %c0_2] : memref<32x32xf32, #tpu.memory_space<vmem>>, vector<32x32xf32>
    %cst = arith.constant dense<0.000000e+00> : vector<16x32xf32>
    %2 = tpu.matmul %0, %1, %cst {dimension_numbers = #tpu.dot_dimension_numbers<[1], [0], [0], [1], [0, 0, 1, 1], [], []>} : vector<16x32xf32>, vector<32x32xf32>, vector<16x32xf32> -> vector<16x32xf32>
    %c0_3 = arith.constant 0 : index
    %c0_4 = arith.constant 0 : index
    %3 = vector.load %arg3[%c0_3, %c0_4] : memref<1x32xf32, #tpu.memory_space<vmem>>, vector<1x32xf32>
    %4 = vector.broadcast %3 : vector<1x32xf32> to vector<16x32xf32>
    %5 = arith.addf %2, %4 : vector<16x32xf32>
    %6 = math.tanh %5 : vector<16x32xf32>
    %c0_5 = arith.constant 0 : index
    %c0_6 = arith.constant 0 : index
    %7 = vector.load %arg4[%c0_5, %c0_6] : memref<1x32xf32, #tpu.memory_space<vmem>>, vector<1x32xf32>
    %8 = vector.broadcast %7 : vector<1x32xf32> to vector<16x32xf32>
    %9 = arith.mulf %6, %8 : vector<16x32xf32>
    %cst_7 = arith.constant dense<0.000000e+00> : vector<16xf32>
    %10 = vector.multi_reduction <add>, %9, %cst_7 [1] : vector<16x32xf32> to vector<16xf32>
    %11 = vector.shape_cast %10 : vector<16xf32> to vector<16x1xf32>
    %cst_8 = arith.constant dense<0.000000e+00> : vector<1xf32>
    %12 = vector.multi_reduction <add>, %11, %cst_8 [0] : vector<16x1xf32> to vector<1xf32>
    %13 = vector.shape_cast %12 : vector<1xf32> to vector<1x1xf32>
    %cst_9 = arith.constant 1.600000e+01 : f32
    %14 = vector.broadcast %cst_9 : f32 to vector<1x1xf32>
    %15 = arith.divf %13, %14 : vector<1x1xf32>
    %16 = arith.subf %15, %15 : vector<1x1xf32>
    %17 = math.exp %16 : vector<1x1xf32>
    %18 = tpu.reciprocal %17 {approx = true} : vector<1x1xf32> -> vector<1x1xf32>
    %cst_10 = arith.constant 0.000000e+00 : f32
    %19 = vector.broadcast %cst_10 : f32 to vector<16x32xf32>
    %20 = arith.mulf %17, %18 : vector<1x1xf32>
    %21 = vector.broadcast %20 : vector<1x1xf32> to vector<16x32xf32>
    %22 = arith.mulf %21, %0 : vector<16x32xf32>
    %23 = arith.addf %19, %22 : vector<16x32xf32>
    %cst_11 = arith.constant dense<0.000000e+00> : vector<32xf32>
    %24 = vector.multi_reduction <add>, %23, %cst_11 [0] : vector<16x32xf32> to vector<32xf32>
    %25 = vector.shape_cast %24 : vector<32xf32> to vector<1x32xf32>
    %cst_12 = arith.constant 1.600000e+01 : f32
    %26 = vector.broadcast %cst_12 : f32 to vector<1x32xf32>
    %27 = arith.divf %25, %26 : vector<1x32xf32>
    %28 = vector.broadcast %27 : vector<1x32xf32> to vector<16x32xf32>
    %29 = arith.subf %23, %28 : vector<16x32xf32>
    %30 = arith.mulf %29, %29 : vector<16x32xf32>
    %cst_13 = arith.constant dense<0.000000e+00> : vector<32xf32>
    %31 = vector.multi_reduction <add>, %30, %cst_13 [0] : vector<16x32xf32> to vector<32xf32>
    %32 = vector.shape_cast %31 : vector<32xf32> to vector<1x32xf32>
    %cst_14 = arith.constant 1.600000e+01 : f32
    %33 = vector.broadcast %cst_14 : f32 to vector<1x32xf32>
    %34 = arith.divf %32, %33 : vector<1x32xf32>
    %cst_15 = arith.constant 9.99999974E-6 : f32
    %35 = vector.broadcast %cst_15 : f32 to vector<1x32xf32>
    %36 = arith.addf %34, %35 : vector<1x32xf32>
    %37 = math.rsqrt %36 : vector<1x32xf32>
    %38 = vector.broadcast %37 : vector<1x32xf32> to vector<16x32xf32>
    %39 = arith.mulf %29, %38 : vector<16x32xf32>
    %c0_16 = arith.constant 0 : index
    %c0_17 = arith.constant 0 : index
    %40 = vector.load %arg5[%c0_16, %c0_17] : memref<1x32xf32, #tpu.memory_space<vmem>>, vector<1x32xf32>
    %41 = vector.broadcast %40 : vector<1x32xf32> to vector<16x32xf32>
    %42 = arith.mulf %39, %41 : vector<16x32xf32>
    %c0_18 = arith.constant 0 : index
    %c0_19 = arith.constant 0 : index
    %43 = vector.load %arg6[%c0_18, %c0_19] : memref<1x32xf32, #tpu.memory_space<vmem>>, vector<1x32xf32>
    %44 = vector.broadcast %43 : vector<1x32xf32> to vector<16x32xf32>
    %45 = arith.addf %42, %44 : vector<16x32xf32>
    %c0_20 = arith.constant 0 : index
    %c0_21 = arith.constant 0 : index
    %46 = vector.load %arg7[%c0_20, %c0_21] : memref<16x32xf32, #tpu.memory_space<vmem>>, vector<16x32xf32>
    tpu.vector_store %arg7[%c0_20, %c0_21], %45 {strides = array<i32>} : memref<16x32xf32, #tpu.memory_space<vmem>>, vector<16x32xf32>,
    return
  }
  func.func @transform_0(%arg0: i32) -> (i32, i32) {
    %c0_i32 = arith.constant 0 : i32
    %c0_i32_0 = arith.constant 0 : i32
    %c0_i32_1 = arith.constant 0 : i32
    return %c0_i32, %c0_i32_0 : i32, i32
  }
  func.func @transform_1(%arg0: i32) -> (i32, i32) {
    %c0_i32 = arith.constant 0 : i32
    %c0_i32_0 = arith.constant 0 : i32
    %c0_i32_1 = arith.constant 0 : i32
    return %c0_i32, %c0_i32_0 : i32, i32
  }
  func.func @transform_2(%arg0: i32) -> (i32, i32) {
    %c0_i32 = arith.constant 0 : i32
    %c0_i32_0 = arith.constant 0 : i32
    %c0_i32_1 = arith.constant 0 : i32
    return %c0_i32, %c0_i32_0 : i32, i32
  }
  func.func @transform_3(%arg0: i32) -> (i32, i32) {
    %c0_i32 = arith.constant 0 : i32
    %c0_i32_0 = arith.constant 0 : i32
    %c0_i32_1 = arith.constant 0 : i32
    return %c0_i32, %c0_i32_0 : i32, i32
  }
  func.func @transform_4(%arg0: i32) -> (i32, i32) {
    %c0_i32 = arith.constant 0 : i32
    %c0_i32_0 = arith.constant 0 : i32
    %c0_i32_1 = arith.constant 0 : i32
    return %c0_i32, %c0_i32_0 : i32, i32
  }
  func.func @transform_5(%arg0: i32) -> (i32, i32) {
    %c0_i32 = arith.constant 0 : i32
    %c0_i32_0 = arith.constant 0 : i32
    %c0_i32_1 = arith.constant 0 : i32
    return %c0_i32, %c0_i32_0 : i32, i32
  }
  func.func @transform_6(%arg0: i32) -> (i32, i32) {
    %c0_i32 = arith.constant 0 : i32
    %c0_i32_0 = arith.constant 0 : i32
    %c0_i32_1 = arith.constant 0 : i32
    return %c0_i32, %c0_i32_0 : i32, i32
  }
}

module attributes {stable_mosaic.version = 11 : i64} {
  func.func @_classifier_kernel(%arg0: i32, %arg1: memref<8x32xf32, #tpu.memory_space<vmem>>, %arg2: memref<8x32xf32, #tpu.memory_space<vmem>>, %arg3: memref<8x1xf32, #tpu.memory_space<vmem>>) attributes {dimension_semantics = [#tpu.dimension_semantics<arbitrary>], iteration_bounds = array<i64: 1>, scalar_prefetch = 0 : i64, scratch_operands = 0 : i64, tpu.core_type = #tpu.core_type<tc>, window_params = [{pipeline_mode = #tpu.pipeline_mode<synchronous>, transform_indices = @transform_0, window_bounds = array<i64: 8, 32>}, {pipeline_mode = #tpu.pipeline_mode<synchronous>, transform_indices = @transform_1, window_bounds = array<i64: 8, 32>}, {pipeline_mode = #tpu.pipeline_mode<synchronous>, transform_indices = @transform_2, window_bounds = array<i64: 8, 1>}]} {
    %c0 = arith.constant 0 : index
    %c0_0 = arith.constant 0 : index
    %0 = vector.load %arg1[%c0, %c0_0] : memref<8x32xf32, #tpu.memory_space<vmem>>, vector<8x32xf32>
    %c0_1 = arith.constant 0 : index
    %c0_2 = arith.constant 0 : index
    %1 = vector.load %arg2[%c0_1, %c0_2] : memref<8x32xf32, #tpu.memory_space<vmem>>, vector<8x32xf32>
    %2 = arith.mulf %0, %1 : vector<8x32xf32>
    %cst = arith.constant dense<0.000000e+00> : vector<8xf32>
    %3 = vector.multi_reduction <add>, %2, %cst [1] : vector<8x32xf32> to vector<8xf32>
    %4 = vector.shape_cast %3 : vector<8xf32> to vector<8x1xf32>
    %cst_3 = arith.constant 0.000000e+00 : f32
    %5 = vector.broadcast %cst_3 : f32 to vector<8x1xf32>
    %6 = arith.subf %5, %4 : vector<8x1xf32>
    %7 = math.exp %6 : vector<8x1xf32>
    %cst_4 = arith.constant 1.000000e+00 : f32
    %8 = vector.broadcast %cst_4 : f32 to vector<8x1xf32>
    %9 = arith.addf %8, %7 : vector<8x1xf32>
    %cst_5 = arith.constant 1.000000e+00 : f32
    %10 = vector.broadcast %cst_5 : f32 to vector<8x1xf32>
    %11 = arith.divf %10, %9 : vector<8x1xf32>
    %c0_6 = arith.constant 0 : index
    %c0_7 = arith.constant 0 : index
    %12 = vector.load %arg3[%c0_6, %c0_7] : memref<8x1xf32, #tpu.memory_space<vmem>>, vector<8x1xf32>
    tpu.vector_store %arg3[%c0_6, %c0_7], %11 {strides = array<i32>} : memref<8x1xf32, #tpu.memory_space<vmem>>, vector<8x1xf32>,
    return
  }
  func.func @transform_0(%arg0: i32) -> (i32, i32) {
    %c0_i32 = arith.constant 0 : i32
    %c0_i32_0 = arith.constant 0 : i32
    %c0_i32_1 = arith.constant 0 : i32
    return %c0_i32, %c0_i32_0 : i32, i32
  }
  func.func @transform_1(%arg0: i32) -> (i32, i32) {
    %c0_i32 = arith.constant 0 : i32
    %c0_i32_0 = arith.constant 0 : i32
    %c0_i32_1 = arith.constant 0 : i32
    return %c0_i32, %c0_i32_0 : i32, i32
  }
  func.func @transform_2(%arg0: i32) -> (i32, i32) {
    %c0_i32 = arith.constant 0 : i32
    %c0_i32_0 = arith.constant 0 : i32
    %c0_i32_1 = arith.constant 0 : i32
    return %c0_i32, %c0_i32_0 : i32, i32
  }
}

</mosaic_0001>

<llo_original>
// kernel: model_forward.9
$region0: #{model_forward.9}
  #allocation0 [shape = 'u32[]', space=smem, size = 0x4, offset = 0x4, fixed_abs, tag = 'smem constant byte address 0x4 - core index']
  #allocation1 [shape = 'u32[144,128]{1,0:T(1,128)}', space=vmem, size = 0x12000, scoped, tag = 'internal scratch']
  %s0 = inlined_call_operand.vmem [shape: f32[8,32], index: 0, kind: input, shape index: {}]
  %s1 = inlined_call_operand.vmem [shape: f32[8,32], index: 1, kind: input, shape index: {}]
  %s2 = inlined_call_operand.vmem [shape: f32[8,1], index: 2, kind: output, shape index: {}]
  %s3 = sld [smem:[#allocation0]]
  $region18: #{model_forward.9} parent=0
    _
  %s5 = ssub.s32 1, %s3
  %s6 = scalar_select 0, %s5, %s3
  // Predicated region
  $region2: #{model_forward.9} parent=0 // pred_check
    _
  $region3: #{model_forward.9} parent=0 // pred_check_branch
    %8 = sbr.rel (0) target = $region5
  $region4: #{model_forward.9} parent=0 // pred_region
    _
  $region5: #{model_forward.9} parent=0 // pred_fallthru
    _
  // Predicated region
  $region6: #{model_forward.9} parent=0 // pred_check
    _
  $region7: #{model_forward.9} parent=0 // pred_check_branch
    %10 = sbr.rel (0) target = $region9
  $region8: #{model_forward.9} parent=0 // pred_region
    _
  $region9: #{model_forward.9} parent=0 // pred_fallthru
    _
  %v11 = vld [vmem:[%s0] sm:$0xff]
  %v12 = vld [vmem:[%s1] sm:$0xff]
  %v13 = vmul.f32 %v11, %v12
  %vm14 = vcmask 261120
  %v15 = vsel %vm14, %v13, 0.0
  %16 = vadd.xlane.f32.xlu0 %v15
  %v17 = vpop.xlane.xlu0 %16
  %v18 = vsub.f32 0.0, %v17
  %v19 = vmul.f32 %v18, 1.442695
  %v20 = vpow.pop %v19
  %v21 = vadd.f32 %v20, 1.0
  %v22 = vrcp.pop %v21
  %v23 = vmul.f32 1.0, %v22
  %vm24 = vcmask 7168
  %25 = vst.msk [vmem:[%s2] sm:$0xff] %vm24, %v23
  // Predicated region
  $region10: #{model_forward.9} parent=0 // pred_check
    _
  $region11: #{model_forward.9} parent=0 // pred_check_branch
    %27 = sbr.rel (0) target = $region13
  $region12: #{model_forward.9} parent=0 // pred_region
    _
  $region13: #{model_forward.9} parent=0 // pred_fallthru
    _
  // Predicated region
  $region14: #{model_forward.9} parent=0 // pred_check
    _
  $region15: #{model_forward.9} parent=0 // pred_check_branch
    %29 = sbr.rel (0) target = $region17
  $region16: #{model_forward.9} parent=0 // pred_region
    _
  $region17: #{model_forward.9} parent=0 // pred_fallthru
    _

// kernel: model_forward.8
$region0: #{model_forward.8}
  #allocation0 [shape = 'u32[]', space=smem, size = 0x4, offset = 0x4, fixed_abs, tag = 'smem constant byte address 0x4 - core index']
  #allocation1 [shape = 'u32[144,128]{1,0:T(1,128)}', space=vmem, size = 0x12000, scoped, tag = 'internal scratch']
  %s0 = inlined_call_operand.vmem [shape: f32[16,32], index: 0, kind: input, shape index: {}]
  %s1 = inlined_call_operand.vmem [shape: f32[32,32], index: 1, kind: input, shape index: {}]
  %s2 = inlined_call_operand.vmem [shape: f32[1,32], index: 2, kind: input, shape index: {}]
  %s3 = inlined_call_operand.vmem [shape: f32[1,32], index: 3, kind: input, shape index: {}]
  %s4 = inlined_call_operand.vmem [shape: f32[1,32], index: 4, kind: input, shape index: {}]
  %s5 = inlined_call_operand.vmem [shape: f32[1,32], index: 5, kind: input, shape index: {}]
  %s6 = inlined_call_operand.vmem [shape: f32[16,32], index: 6, kind: output, shape index: {}]
  %s7 = sld [smem:[#allocation0]]
  $region34: #{model_forward.8} parent=0
    _
  %s9 = ssub.s32 1, %s7
  %s10 = scalar_select 0, %s9, %s7
  // Predicated region
  $region2: #{model_forward.8} parent=0 // pred_check
    _
  $region3: #{model_forward.8} parent=0 // pred_check_branch
    %12 = sbr.rel (0) target = $region5
  $region4: #{model_forward.8} parent=0 // pred_region
    _
  $region5: #{model_forward.8} parent=0 // pred_fallthru
    _
  // Predicated region
  $region6: #{model_forward.8} parent=0 // pred_check
    _
  $region7: #{model_forward.8} parent=0 // pred_check_branch
    %14 = sbr.rel (0) target = $region9
  $region8: #{model_forward.8} parent=0 // pred_region
    _
  $region9: #{model_forward.8} parent=0 // pred_fallthru
    _
  // Predicated region
  $region10: #{model_forward.8} parent=0 // pred_check
    _
  $region11: #{model_forward.8} parent=0 // pred_check_branch
    %16 = sbr.rel (0) target = $region13
  $region12: #{model_forward.8} parent=0 // pred_region
    _
  $region13: #{model_forward.8} parent=0 // pred_fallthru
    _
  // Predicated region
  $region14: #{model_forward.8} parent=0 // pred_check
    _
  $region15: #{model_forward.8} parent=0 // pred_check_branch
    %18 = sbr.rel (0) target = $region17
  $region16: #{model_forward.8} parent=0 // pred_region
    _
  $region17: #{model_forward.8} parent=0 // pred_fallthru
    _
  // Predicated region
  $region18: #{model_forward.8} parent=0 // pred_check
    _
  $region19: #{model_forward.8} parent=0 // pred_check_branch
    %20 = sbr.rel (0) target = $region21
  $region20: #{model_forward.8} parent=0 // pred_region
    _
  $region21: #{model_forward.8} parent=0 // pred_fallthru
    _
  // Predicated region
  $region22: #{model_forward.8} parent=0 // pred_check
    _
  $region23: #{model_forward.8} parent=0 // pred_check_branch
    %22 = sbr.rel (0) target = $region25
  $region24: #{model_forward.8} parent=0 // pred_region
    _
  $region25: #{model_forward.8} parent=0 // pred_fallthru
    _
  %v23 = vld [vmem:[%s0] sm:$0xff]
  %v24 = vld [vmem:[%s0 + $0x8] sm:$0xff]
  %v25 = vld [vmem:[%s1] sm:$0xff]
  %v26 = vld [vmem:[%s1 + $0x8] sm:$0xff]
  %v27 = vld [vmem:[%s1 + $0x10] sm:$0xff]
  %v28 = vld [vmem:[%s1 + $0x18] sm:$0xff]
  %v29 = vld [vmem:[%s2] sm:$0x1]
  %v31 = vlaneseq
  %v32 = vshrl.u32 %v31, 7
  %v33 = vsub.s32 0, %v32
  %v34 = vrot.slane %v29, %v33
  %vm36 = vcmask 261120
  %v38 = vsel %vm36, %v23, 0
  %v41 = vsel %vm36, %v24, 0
  %43 = vmatprep.subr.mxu0 0.0
  %44 = vmatpush1.msra.mxu0 0.0
  %45 = vmatprep.subr.mxu0 0.0
  %46 = vmatpush1.msra.mxu0 0.0
  %47 = vmatprep.subr.mxu0 0.0
  %48 = vmatpush1.msra.mxu0 0.0
  %49 = vmatprep.subr.mxu0 0.0
  %50 = vmatpush1.msra.mxu0 0.0
  %51 = vmatprep.subr.mxu0 0.0
  %52 = vmatpush1.msra.mxu0 0.0
  %53 = vmatprep.subr.mxu0 0.0
  %54 = vmatpush1.msra.mxu0 0.0
  %55 = vmatprep.subr.mxu0 0.0
  %56 = vmatpush1.msra.mxu0 0.0
  %57 = vmatprep.subr.mxu0 0.0
  %58 = vmatpush1.msra.mxu0 0.0
  %59 = vmatprep.subr.mxu0 0.0
  %60 = vmatpush1.msra.mxu0 0.0
  %61 = vmatprep.subr.mxu0 0.0
  %62 = vmatpush1.msra.mxu0 0.0
  %63 = vmatprep.subr.mxu0 0.0
  %64 = vmatpush1.msra.mxu0 0.0
  %65 = vmatprep.subr.mxu0 0.0
  %66 = vmatpush1.msra.mxu0 0.0
  %67 = vmatprep.subr.mxu0 0.0
  %68 = vmatpush1.msra.mxu0 %v28
  %69 = vmatprep.subr.mxu0 0.0
  %70 = vmatpush1.msra.mxu0 %v27
  %71 = vmatprep.subr.mxu0 0.0
  %72 = vmatpush1.msra.mxu0 %v26
  %73 = vmatprep.subr.mxu0 0.0
  %74 = vmatpush1.msra.mxu0 %v25
  %75 = vmatprep.subr.mxu0 0.0
  %76 = vmatpush2.msra.mxu0 0.0
  %77 = vmatprep.subr.mxu0 0.0
  %78 = vmatpush2.msra.mxu0 0.0
  %79 = vmatprep.subr.mxu0 0.0
  %80 = vmatpush2.msra.mxu0 0.0
  %81 = vmatprep.subr.mxu0 0.0
  %82 = vmatpush2.msra.mxu0 0.0
  %83 = vmatprep.subr.mxu0 0.0
  %84 = vmatpush2.msra.mxu0 0.0
  %85 = vmatprep.subr.mxu0 0.0
  %86 = vmatpush2.msra.mxu0 0.0
  %87 = vmatprep.subr.mxu0 0.0
  %88 = vmatpush2.msra.mxu0 0.0
  %89 = vmatprep.subr.mxu0 0.0
  %90 = vmatpush2.msra.mxu0 0.0
  %91 = vmatprep.subr.mxu0 0.0
  %92 = vmatpush2.msra.mxu0 0.0
  %93 = vmatprep.subr.mxu0 0.0
  %94 = vmatpush2.msra.mxu0 0.0
  %95 = vmatprep.subr.mxu0 0.0
  %96 = vmatpush2.msra.mxu0 0.0
  %97 = vmatprep.subr.mxu0 0.0
  %98 = vmatpush2.msra.mxu0 0.0
  %99 = vmatprep.subr.mxu0 0.0
  %100 = vmatpush2.msra.mxu0 0.0
  %101 = vmatprep.subr.mxu0 0.0
  %102 = vmatpush2.msra.mxu0 0.0
  %103 = vmatprep.subr.mxu0 0.0
  %104 = vmatpush2.msra.mxu0 0.0
  %105 = vmatprep.subr.mxu0 0.0
  %106 = vmatpush2.msra.mxu0 0.0
  %107 = vmatprep.mubr.f32.mxu0 0.0
  %108 = vmatmul.mubr.f32.gmra.mxu0 %v38
  %v109 = vpop.f32.mrf.mxu0
  %v110 = vadd.f32 %v34, %v109
  %v111 = vpop.f32.mrf.mxu0
  %112 = vmatprep.mubr.f32.mxu0 0.0
  %113 = vmatmul.mubr.f32.gmra.mxu0 %v41
  %v114 = vpop.f32.mrf.mxu0
  %v115 = vadd.f32 %v34, %v114
  %v116 = vpop.f32.mrf.mxu0
  %117 = vdwg.mxu0
  %v118 = vtanh.pop %v110
  %v119 = vtanh.pop %v115
  %v120 = vld [vmem:[%s3] sm:$0x1]
  %v122 = vlaneseq
  %v123 = vshrl.u32 %v122, 7
  %v124 = vsub.s32 0, %v123
  %v125 = vrot.slane %v120, %v124
  %v127 = vmul.f32 %v118, %v125
  %v128 = vmul.f32 %v119, %v125
  %v129 = vsel %vm36, %v127, 0.0
  %130 = vadd.xlane.f32.xlu0 %v129
  %v131 = vpop.xlane.xlu0 %130
  %v132 = vsel %vm36, %v128, 0.0
  %133 = vadd.xlane.f32.xlu0 %v132
  %v134 = vpop.xlane.xlu0 %133
  %v135 = vadd.f32 %v131, %v134
  %v136 = vrot.slane %v135, 4
  %v137 = vadd.f32 %v135, %v136
  %v138 = vrot.slane %v137, 2
  %v139 = vadd.f32 %v137, %v138
  %v140 = vrot.slane %v139, 1
  %v141 = vadd.f32 %v139, %v140
  %v142 = vrcp.pop 16.0
  %v143 = vmul.f32 %v141, %v142
  %v144 = vsub.f32 %v143, %v143
  %v145 = vmul.f32 %v144, 1.442695
  %v146 = vpow.pop %v145
  %v147 = vrcp.pop %v146
  %v148 = vmul.f32 %v146, %v147
  %v149 = vmul.f32 %v148, %v23
  %v150 = vmul.f32 %v148, %v24
  %v151 = vadd.f32 %v149, 0.0
  %v152 = vadd.f32 %v150, 0.0
  %v153 = vsel %vm36, %v151, 0.0
  %v154 = vsel %vm36, %v152, 0.0
  %v155 = vadd.f32 %v153, %v154
  %v156 = vrot.slane %v155, 4
  %v157 = vadd.f32 %v155, %v156
  %v158 = vrot.slane %v157, 2
  %v159 = vadd.f32 %v157, %v158
  %v160 = vrot.slane %v159, 1
  %v161 = vadd.f32 %v159, %v160
  %v162 = vmul.f32 %v161, %v142
  %v163 = vsub.f32 %v151, %v162
  %v164 = vsub.f32 %v152, %v162
  %v165 = vmul.f32 %v163, %v163
  %v166 = vmul.f32 %v164, %v164
  %v167 = vsel %vm36, %v165, 0.0
  %v168 = vsel %vm36, %v166, 0.0
  %v169 = vadd.f32 %v167, %v168
  %v170 = vrot.slane %v169, 4
  %v171 = vadd.f32 %v169, %v170
  %v172 = vrot.slane %v171, 2
  %v173 = vadd.f32 %v171, %v172
  %v174 = vrot.slane %v173, 1
  %v175 = vadd.f32 %v173, %v174
  %v176 = vmul.f32 %v175, %v142
  %v177 = vadd.f32 %v176, 1e-05
  %v178 = vrsqrt.pop %v177
  %v179 = vmul.f32 %v163, %v178
  %v180 = vmul.f32 %v164, %v178
  %v181 = vld [vmem:[%s4] sm:$0x1]
  %v183 = vlaneseq
  %v184 = vshrl.u32 %v183, 7
  %v185 = vsub.s32 0, %v184
  %v186 = vrot.slane %v181, %v185
  %v188 = vmul.f32 %v179, %v186
  %v189 = vmul.f32 %v180, %v186
  %v190 = vld [vmem:[%s5] sm:$0x1]
  %v192 = vlaneseq
  %v193 = vshrl.u32 %v192, 7
  %v194 = vsub.s32 0, %v193
  %v195 = vrot.slane %v190, %v194
  %v197 = vadd.f32 %v188, %v195
  %v198 = vadd.f32 %v189, %v195
  %199 = vst.msk [vmem:[%s6] sm:$0xff] %vm36, %v197
  %200 = vst.msk [vmem:[%s6 + $0x8] sm:$0xff] %vm36, %v198
  // Predicated region
  $region26: #{model_forward.8} parent=0 // pred_check
    _
  $region27: #{model_forward.8} parent=0 // pred_check_branch
    %202 = sbr.rel (0) target = $region29
  $region28: #{model_forward.8} parent=0 // pred_region
    _
  $region29: #{model_forward.8} parent=0 // pred_fallthru
    _
  // Predicated region
  $region30: #{model_forward.8} parent=0 // pred_check
    _
  $region31: #{model_forward.8} parent=0 // pred_check_branch
    %204 = sbr.rel (0) target = $region33
  $region32: #{model_forward.8} parent=0 // pred_region
    _
  $region33: #{model_forward.8} parent=0 // pred_fallthru
    _

// kernel: model_forward.5
$region0: #{model_forward.5}
  #allocation0 [shape = 'u32[]', space=smem, size = 0x4, offset = 0x4, fixed_abs, tag = 'smem constant byte address 0x4 - core index']
  #allocation1 [shape = 'u32[144,128]{1,0:T(1,128)}', space=vmem, size = 0x12000, scoped, tag = 'internal scratch']
  %s0 = inlined_call_operand.vmem [shape: f32[16,16], index: 0, kind: input, shape index: {}]
  %s1 = inlined_call_operand.vmem [shape: f32[16,16], index: 1, kind: input, shape index: {}]
  %s2 = inlined_call_operand.vmem [shape: f32[16,32], index: 2, kind: input, shape index: {}]
  %s3 = inlined_call_operand.vmem [shape: f32[1,32], index: 3, kind: input, shape index: {}]
  %s4 = inlined_call_operand.vmem [shape: f32[16,32], index: 4, kind: input, shape index: {}]
  %s5 = inlined_call_operand.vmem [shape: f32[1,32], index: 5, kind: input, shape index: {}]
  %s6 = inlined_call_operand.vmem [shape: f32[8,32], index: 6, kind: input, shape index: {}]
  %s7 = inlined_call_operand.vmem [shape: f32[8,32], index: 7, kind: input, shape index: {}]
  %s8 = inlined_call_operand.vmem [shape: f32[16,16], index: 8, kind: input, shape index: {}]
  %s9 = inlined_call_operand.vmem [shape: f32[16,32], index: 9, kind: output, shape index: {}]
  %s10 = sld [smem:[#allocation0]]
  $region46: #{model_forward.5} parent=0
    _
  %s12 = ssub.s32 1, %s10
  %s13 = scalar_select 0, %s12, %s10
  // Predicated region
  $region2: #{model_forward.5} parent=0 // pred_check
    _
  $region3: #{model_forward.5} parent=0 // pred_check_branch
    %15 = sbr.rel (0) target = $region5
  $region4: #{model_forward.5} parent=0 // pred_region
    _
  $region5: #{model_forward.5} parent=0 // pred_fallthru
    _
  // Predicated region
  $region6: #{model_forward.5} parent=0 // pred_check
    _
  $region7: #{model_forward.5} parent=0 // pred_check_branch
    %17 = sbr.rel (0) target = $region9
  $region8: #{model_forward.5} parent=0 // pred_region
    _
  $region9: #{model_forward.5} parent=0 // pred_fallthru
    _
  // Predicated region
  $region10: #{model_forward.5} parent=0 // pred_check
    _
  $region11: #{model_forward.5} parent=0 // pred_check_branch
    %19 = sbr.rel (0) target = $region13
  $region12: #{model_forward.5} parent=0 // pred_region
    _
  $region13: #{model_forward.5} parent=0 // pred_fallthru
    _
  // Predicated region
  $region14: #{model_forward.5} parent=0 // pred_check
    _
  $region15: #{model_forward.5} parent=0 // pred_check_branch
    %21 = sbr.rel (0) target = $region17
  $region16: #{model_forward.5} parent=0 // pred_region
    _
  $region17: #{model_forward.5} parent=0 // pred_fallthru
    _
  // Predicated region
  $region18: #{model_forward.5} parent=0 // pred_check
    _
  $region19: #{model_forward.5} parent=0 // pred_check_branch
    %23 = sbr.rel (0) target = $region21
  $region20: #{model_forward.5} parent=0 // pred_region
    _
  $region21: #{model_forward.5} parent=0 // pred_fallthru
    _
  // Predicated region
  $region22: #{model_forward.5} parent=0 // pred_check
    _
  $region23: #{model_forward.5} parent=0 // pred_check_branch
    %25 = sbr.rel (0) target = $region25
  $region24: #{model_forward.5} parent=0 // pred_region
    _
  $region25: #{model_forward.5} parent=0 // pred_fallthru
    _
  // Predicated region
  $region26: #{model_forward.5} parent=0 // pred_check
    _
  $region27: #{model_forward.5} parent=0 // pred_check_branch
    %27 = sbr.rel (0) target = $region29
  $region28: #{model_forward.5} parent=0 // pred_region
    _
  $region29: #{model_forward.5} parent=0 // pred_fallthru
    _
  // Predicated region
  $region30: #{model_forward.5} parent=0 // pred_check
    _
  $region31: #{model_forward.5} parent=0 // pred_check_branch
    %29 = sbr.rel (0) target = $region33
  $region32: #{model_forward.5} parent=0 // pred_region
    _
  $region33: #{model_forward.5} parent=0 // pred_fallthru
    _
  // Predicated region
  $region34: #{model_forward.5} parent=0 // pred_check
    _
  $region35: #{model_forward.5} parent=0 // pred_check_branch
    %31 = sbr.rel (0) target = $region37
  $region36: #{model_forward.5} parent=0 // pred_region
    _
  $region37: #{model_forward.5} parent=0 // pred_fallthru
    _
  %v32 = vld [vmem:[%s0] sm:$0xff]
  %v33 = vld [vmem:[%s0 + $0x8] sm:$0xff]
  %v34 = vld [vmem:[%s2] sm:$0xff]
  %v35 = vld [vmem:[%s2 + $0x8] sm:$0xff]
  %v36 = vld [vmem:[%s3] sm:$0x1]
  %v38 = vlaneseq
  %v39 = vshrl.u32 %v38, 7
  %v40 = vsub.s32 0, %v39
  %v41 = vrot.slane %v36, %v40
  %vm43 = vcmask 130048
  %v45 = vsel %vm43, %v32, 0
  %v48 = vsel %vm43, %v33, 0
  %50 = vmatprep.subr.mxu0 0.0
  %51 = vmatpush1.msra.mxu0 0.0
  %52 = vmatprep.subr.mxu0 0.0
  %53 = vmatpush1.msra.mxu0 0.0
  %54 = vmatprep.subr.mxu0 0.0
  %55 = vmatpush1.msra.mxu0 0.0
  %56 = vmatprep.subr.mxu0 0.0
  %57 = vmatpush1.msra.mxu0 0.0
  %58 = vmatprep.subr.mxu0 0.0
  %59 = vmatpush1.msra.mxu0 0.0
  %60 = vmatprep.subr.mxu0 0.0
  %61 = vmatpush1.msra.mxu0 0.0
  %62 = vmatprep.subr.mxu0 0.0
  %63 = vmatpush1.msra.mxu0 0.0
  %64 = vmatprep.subr.mxu0 0.0
  %65 = vmatpush1.msra.mxu0 0.0
  %66 = vmatprep.subr.mxu0 0.0
  %67 = vmatpush1.msra.mxu0 0.0
  %68 = vmatprep.subr.mxu0 0.0
  %69 = vmatpush1.msra.mxu0 0.0
  %70 = vmatprep.subr.mxu0 0.0
  %71 = vmatpush1.msra.mxu0 0.0
  %72 = vmatprep.subr.mxu0 0.0
  %73 = vmatpush1.msra.mxu0 0.0
  %74 = vmatprep.subr.mxu0 0.0
  %75 = vmatpush1.msra.mxu0 0.0
  %76 = vmatprep.subr.mxu0 0.0
  %77 = vmatpush1.msra.mxu0 0.0
  %78 = vmatprep.subr.mxu0 0.0
  %79 = vmatpush1.msra.mxu0 %v35
  %80 = vmatprep.subr.mxu0 0.0
  %81 = vmatpush1.msra.mxu0 %v34
  %82 = vmatprep.subr.mxu0 0.0
  %83 = vmatpush2.msra.mxu0 0.0
  %84 = vmatprep.subr.mxu0 0.0
  %85 = vmatpush2.msra.mxu0 0.0
  %86 = vmatprep.subr.mxu0 0.0
  %87 = vmatpush2.msra.mxu0 0.0
  %88 = vmatprep.subr.mxu0 0.0
  %89 = vmatpush2.msra.mxu0 0.0
  %90 = vmatprep.subr.mxu0 0.0
  %91 = vmatpush2.msra.mxu0 0.0
  %92 = vmatprep.subr.mxu0 0.0
  %93 = vmatpush2.msra.mxu0 0.0
  %94 = vmatprep.subr.mxu0 0.0
  %95 = vmatpush2.msra.mxu0 0.0
  %96 = vmatprep.subr.mxu0 0.0
  %97 = vmatpush2.msra.mxu0 0.0
  %98 = vmatprep.subr.mxu0 0.0
  %99 = vmatpush2.msra.mxu0 0.0
  %100 = vmatprep.subr.mxu0 0.0
  %101 = vmatpush2.msra.mxu0 0.0
  %102 = vmatprep.subr.mxu0 0.0
  %103 = vmatpush2.msra.mxu0 0.0
  %104 = vmatprep.subr.mxu0 0.0
  %105 = vmatpush2.msra.mxu0 0.0
  %106 = vmatprep.subr.mxu0 0.0
  %107 = vmatpush2.msra.mxu0 0.0
  %108 = vmatprep.subr.mxu0 0.0
  %109 = vmatpush2.msra.mxu0 0.0
  %110 = vmatprep.subr.mxu0 0.0
  %111 = vmatpush2.msra.mxu0 0.0
  %112 = vmatprep.subr.mxu0 0.0
  %113 = vmatpush2.msra.mxu0 0.0
  %114 = vmatprep.mubr.f32.mxu0 0.0
  %115 = vmatmul.mubr.f32.gmra.mxu0 %v45
  %v116 = vpop.f32.mrf.mxu0
  %v117 = vadd.f32 %v41, %v116
  %v118 = vpop.f32.mrf.mxu0
  %119 = vmatprep.mubr.f32.mxu0 0.0
  %120 = vmatmul.mubr.f32.gmra.mxu0 %v48
  %v121 = vpop.f32.mrf.mxu0
  %v122 = vadd.f32 %v41, %v121
  %v123 = vpop.f32.mrf.mxu0
  %124 = vdwg.mxu0
  %v125 = vld [vmem:[%s1] sm:$0xff]
  %v126 = vld [vmem:[%s1 + $0x8] sm:$0xff]
  %v127 = vld [vmem:[%s4] sm:$0xff]
  %v128 = vld [vmem:[%s4 + $0x8] sm:$0xff]
  %v129 = vld [vmem:[%s5] sm:$0x1]
  %v131 = vlaneseq
  %v132 = vshrl.u32 %v131, 7
  %v133 = vsub.s32 0, %v132
  %v134 = vrot.slane %v129, %v133
  %v137 = vsel %vm43, %v125, 0
  %v140 = vsel %vm43, %v126, 0
  %142 = vmatprep.subr.mxu0 0.0
  %143 = vmatpush1.msra.mxu0 0.0
  %144 = vmatprep.subr.mxu0 0.0
  %145 = vmatpush1.msra.mxu0 0.0
  %146 = vmatprep.subr.mxu0 0.0
  %147 = vmatpush1.msra.mxu0 0.0
  %148 = vmatprep.subr.mxu0 0.0
  %149 = vmatpush1.msra.mxu0 0.0
  %150 = vmatprep.subr.mxu0 0.0
  %151 = vmatpush1.msra.mxu0 0.0
  %152 = vmatprep.subr.mxu0 0.0
  %153 = vmatpush1.msra.mxu0 0.0
  %154 = vmatprep.subr.mxu0 0.0
  %155 = vmatpush1.msra.mxu0 0.0
  %156 = vmatprep.subr.mxu0 0.0
  %157 = vmatpush1.msra.mxu0 0.0
  %158 = vmatprep.subr.mxu0 0.0
  %159 = vmatpush1.msra.mxu0 0.0
  %160 = vmatprep.subr.mxu0 0.0
  %161 = vmatpush1.msra.mxu0 0.0
  %162 = vmatprep.subr.mxu0 0.0
  %163 = vmatpush1.msra.mxu0 0.0
  %164 = vmatprep.subr.mxu0 0.0
  %165 = vmatpush1.msra.mxu0 0.0
  %166 = vmatprep.subr.mxu0 0.0
  %167 = vmatpush1.msra.mxu0 0.0
  %168 = vmatprep.subr.mxu0 0.0
  %169 = vmatpush1.msra.mxu0 0.0
  %170 = vmatprep.subr.mxu0 0.0
  %171 = vmatpush1.msra.mxu0 %v128
  %172 = vmatprep.subr.mxu0 0.0
  %173 = vmatpush1.msra.mxu0 %v127
  %174 = vmatprep.subr.mxu0 0.0
  %175 = vmatpush2.msra.mxu0 0.0
  %176 = vmatprep.subr.mxu0 0.0
  %177 = vmatpush2.msra.mxu0 0.0
  %178 = vmatprep.subr.mxu0 0.0
  %179 = vmatpush2.msra.mxu0 0.0
  %180 = vmatprep.subr.mxu0 0.0
  %181 = vmatpush2.msra.mxu0 0.0
  %182 = vmatprep.subr.mxu0 0.0
  %183 = vmatpush2.msra.mxu0 0.0
  %184 = vmatprep.subr.mxu0 0.0
  %185 = vmatpush2.msra.mxu0 0.0
  %186 = vmatprep.subr.mxu0 0.0
  %187 = vmatpush2.msra.mxu0 0.0
  %188 = vmatprep.subr.mxu0 0.0
  %189 = vmatpush2.msra.mxu0 0.0
  %190 = vmatprep.subr.mxu0 0.0
  %191 = vmatpush2.msra.mxu0 0.0
  %192 = vmatprep.subr.mxu0 0.0
  %193 = vmatpush2.msra.mxu0 0.0
  %194 = vmatprep.subr.mxu0 0.0
  %195 = vmatpush2.msra.mxu0 0.0
  %196 = vmatprep.subr.mxu0 0.0
  %197 = vmatpush2.msra.mxu0 0.0
  %198 = vmatprep.subr.mxu0 0.0
  %199 = vmatpush2.msra.mxu0 0.0
  %200 = vmatprep.subr.mxu0 0.0
  %201 = vmatpush2.msra.mxu0 0.0
  %202 = vmatprep.subr.mxu0 0.0
  %203 = vmatpush2.msra.mxu0 0.0
  %204 = vmatprep.subr.mxu0 0.0
  %205 = vmatpush2.msra.mxu0 0.0
  %206 = vmatprep.mubr.f32.mxu0 0.0
  %207 = vmatmul.mubr.f32.gmra.mxu0 %v137
  %v208 = vpop.f32.mrf.mxu0
  %v209 = vadd.f32 %v134, %v208
  %v210 = vpop.f32.mrf.mxu0
  %211 = vmatprep.mubr.f32.mxu0 0.0
  %212 = vmatmul.mubr.f32.gmra.mxu0 %v140
  %v213 = vpop.f32.mrf.mxu0
  %v214 = vadd.f32 %v134, %v213
  %v215 = vpop.f32.mrf.mxu0
  %216 = vdwg.mxu0
  %v217 = vld [vmem:[%s6] sm:$0xff]
  %vm218 = vcmask 261120
  %v220 = vsel %vm218, %v217, 0
  %v223 = vsel %vm218, %v117, 0
  %v226 = vsel %vm218, %v122, 0
  %228 = vmatprep.subr.mxu0 0.0
  %229 = vmatpush1.xpose.msra.mxu0 0.0
  %230 = vmatprep.subr.mxu0 0.0
  %231 = vmatpush1.xpose.msra.mxu0 0.0
  %232 = vmatprep.subr.mxu0 0.0
  %233 = vmatpush1.xpose.msra.mxu0 0.0
  %234 = vmatprep.subr.mxu0 0.0
  %235 = vmatpush1.xpose.msra.mxu0 0.0
  %236 = vmatprep.subr.mxu0 0.0
  %237 = vmatpush1.xpose.msra.mxu0 0.0
  %238 = vmatprep.subr.mxu0 0.0
  %239 = vmatpush1.xpose.msra.mxu0 0.0
  %240 = vmatprep.subr.mxu0 0.0
  %241 = vmatpush1.xpose.msra.mxu0 0.0
  %242 = vmatprep.subr.mxu0 0.0
  %243 = vmatpush1.xpose.msra.mxu0 0.0
  %244 = vmatprep.subr.mxu0 0.0
  %245 = vmatpush1.xpose.msra.mxu0 0.0
  %246 = vmatprep.subr.mxu0 0.0
  %247 = vmatpush1.xpose.msra.mxu0 0.0
  %248 = vmatprep.subr.mxu0 0.0
  %249 = vmatpush1.xpose.msra.mxu0 0.0
  %250 = vmatprep.subr.mxu0 0.0
  %251 = vmatpush1.xpose.msra.mxu0 0.0
  %252 = vmatprep.subr.mxu0 0.0
  %253 = vmatpush1.xpose.msra.mxu0 0.0
  %254 = vmatprep.subr.mxu0 0.0
  %255 = vmatpush1.xpose.msra.mxu0 0.0
  %256 = vmatprep.subr.mxu0 0.0
  %257 = vmatpush1.xpose.msra.mxu0 %v226
  %258 = vmatprep.subr.mxu0 0.0
  %259 = vmatpush1.xpose.msra.mxu0 %v223
  %260 = vmatprep.subr.mxu0 0.0
  %261 = vmatpush2.xpose.msra.mxu0 0.0
  %262 = vmatprep.subr.mxu0 0.0
  %263 = vmatpush2.xpose.msra.mxu0 0.0
  %264 = vmatprep.subr.mxu0 0.0
  %265 = vmatpush2.xpose.msra.mxu0 0.0
  %266 = vmatprep.subr.mxu0 0.0
  %267 = vmatpush2.xpose.msra.mxu0 0.0
  %268 = vmatprep.subr.mxu0 0.0
  %269 = vmatpush2.xpose.msra.mxu0 0.0
  %270 = vmatprep.subr.mxu0 0.0
  %271 = vmatpush2.xpose.msra.mxu0 0.0
  %272 = vmatprep.subr.mxu0 0.0
  %273 = vmatpush2.xpose.msra.mxu0 0.0
  %274 = vmatprep.subr.mxu0 0.0
  %275 = vmatpush2.xpose.msra.mxu0 0.0
  %276 = vmatprep.subr.mxu0 0.0
  %277 = vmatpush2.xpose.msra.mxu0 0.0
  %278 = vmatprep.subr.mxu0 0.0
  %279 = vmatpush2.xpose.msra.mxu0 0.0
  %280 = vmatprep.subr.mxu0 0.0
  %281 = vmatpush2.xpose.msra.mxu0 0.0
  %282 = vmatprep.subr.mxu0 0.0
  %283 = vmatpush2.xpose.msra.mxu0 0.0
  %284 = vmatprep.subr.mxu0 0.0
  %285 = vmatpush2.xpose.msra.mxu0 0.0
  %286 = vmatprep.subr.mxu0 0.0
  %287 = vmatpush2.xpose.msra.mxu0 0.0
  %288 = vmatprep.subr.mxu0 0.0
  %289 = vmatpush2.xpose.msra.mxu0 0.0
  %290 = vmatprep.subr.mxu0 0.0
  %291 = vmatpush2.xpose.msra.mxu0 0.0
  %292 = vmatprep.mubr.f32.mxu0 0.0
  %293 = vmatmul.mubr.f32.gmra.mxu0 %v220
  %v294 = vpop.f32.mrf.mxu0
  %v295 = vadd.f32 0.0, %v294
  %v296 = vpop.f32.mrf.mxu0
  %297 = vdwg.mxu0
  %v298 = vld [vmem:[%s7] sm:$0xff]
  %v300 = vsel %vm218, %v209, 0
  %v303 = vsel %vm218, %v214, 0
  %v306 = vsel %vm218, %v298, 0
  %308 = vmatprep.subr.mxu0 0.0
  %309 = vmatpush1.xpose.msra.mxu0 0.0
  %310 = vmatprep.subr.mxu0 0.0
  %311 = vmatpush1.xpose.msra.mxu0 0.0
  %312 = vmatprep.subr.mxu0 0.0
  %313 = vmatpush1.xpose.msra.mxu0 0.0
  %314 = vmatprep.subr.mxu0 0.0
  %315 = vmatpush1.xpose.msra.mxu0 0.0
  %316 = vmatprep.subr.mxu0 0.0
  %317 = vmatpush1.xpose.msra.mxu0 0.0
  %318 = vmatprep.subr.mxu0 0.0
  %319 = vmatpush1.xpose.msra.mxu0 0.0
  %320 = vmatprep.subr.mxu0 0.0
  %321 = vmatpush1.xpose.msra.mxu0 0.0
  %322 = vmatprep.subr.mxu0 0.0
  %323 = vmatpush1.xpose.msra.mxu0 0.0
  %324 = vmatprep.subr.mxu0 0.0
  %325 = vmatpush1.xpose.msra.mxu0 0.0
  %326 = vmatprep.subr.mxu0 0.0
  %327 = vmatpush1.xpose.msra.mxu0 0.0
  %328 = vmatprep.subr.mxu0 0.0
  %329 = vmatpush1.xpose.msra.mxu0 0.0
  %330 = vmatprep.subr.mxu0 0.0
  %331 = vmatpush1.xpose.msra.mxu0 0.0
  %332 = vmatprep.subr.mxu0 0.0
  %333 = vmatpush1.xpose.msra.mxu0 0.0
  %334 = vmatprep.subr.mxu0 0.0
  %335 = vmatpush1.xpose.msra.mxu0 0.0
  %336 = vmatprep.subr.mxu0 0.0
  %337 = vmatpush1.xpose.msra.mxu0 0.0
  %338 = vmatprep.subr.mxu0 0.0
  %339 = vmatpush1.xpose.msra.mxu0 %v306
  %340 = vmatprep.subr.mxu0 0.0
  %341 = vmatpush2.xpose.msra.mxu0 0.0
  %342 = vmatprep.subr.mxu0 0.0
  %343 = vmatpush2.xpose.msra.mxu0 0.0
  %344 = vmatprep.subr.mxu0 0.0
  %345 = vmatpush2.xpose.msra.mxu0 0.0
  %346 = vmatprep.subr.mxu0 0.0
  %347 = vmatpush2.xpose.msra.mxu0 0.0
  %348 = vmatprep.subr.mxu0 0.0
  %349 = vmatpush2.xpose.msra.mxu0 0.0
  %350 = vmatprep.subr.mxu0 0.0
  %351 = vmatpush2.xpose.msra.mxu0 0.0
  %352 = vmatprep.subr.mxu0 0.0
  %353 = vmatpush2.xpose.msra.mxu0 0.0
  %354 = vmatprep.subr.mxu0 0.0
  %355 = vmatpush2.xpose.msra.mxu0 0.0
  %356 = vmatprep.subr.mxu0 0.0
  %357 = vmatpush2.xpose.msra.mxu0 0.0
  %358 = vmatprep.subr.mxu0 0.0
  %359 = vmatpush2.xpose.msra.mxu0 0.0
  %360 = vmatprep.subr.mxu0 0.0
  %361 = vmatpush2.xpose.msra.mxu0 0.0
  %362 = vmatprep.subr.mxu0 0.0
  %363 = vmatpush2.xpose.msra.mxu0 0.0
  %364 = vmatprep.subr.mxu0 0.0
  %365 = vmatpush2.xpose.msra.mxu0 0.0
  %366 = vmatprep.subr.mxu0 0.0
  %367 = vmatpush2.xpose.msra.mxu0 0.0
  %368 = vmatprep.subr.mxu0 0.0
  %369 = vmatpush2.xpose.msra.mxu0 0.0
  %370 = vmatprep.subr.mxu0 0.0
  %371 = vmatpush2.xpose.msra.mxu0 0.0
  %372 = vmatprep.mubr.f32.mxu0 0.0
  %373 = vmatmul.mubr.f32.gmra.mxu0 %v300
  %v374 = vpop.f32.mrf.mxu0
  %v375 = vadd.f32 0.0, %v374
  %v376 = vpop.f32.mrf.mxu0
  %377 = vmatprep.mubr.f32.mxu0 0.0
  %378 = vmatmul.mubr.f32.gmra.mxu0 %v303
  %v379 = vpop.f32.mrf.mxu0
  %v380 = vadd.f32 0.0, %v379
  %v381 = vpop.f32.mrf.mxu0
  %382 = vdwg.mxu0
  %v383 = vld [vmem:[%s8] sm:$0xff]
  %v384 = vld [vmem:[%s8 + $0x8] sm:$0xff]
  %vm385 = vcmp.gt.f32.partialorder %v383, 0.5
  %vm386 = vcmp.gt.f32.partialorder %v384, 0.5
  %388 = vset.pattern.permute.xlu0 0
  %389 = vperm.xlu0 %388, %v375
  %v390 = vpop.permute.xlu0 %389
  %393 = vset.pattern.permute.xlu0 0
  %394 = vperm.xlu0 %393, %v380
  %v395 = vpop.permute.xlu0 %394
  %v397 = vlaneseq
  %v398 = vshrl.u32 %v397, 7
  %v399 = vsub.s32 0, %v398
  %v400 = vrot.slane %v295, %v399
  %v401 = vadd.f32 %v390, %v400
  %v402 = vadd.f32 %v395, %v400
  %vm403 = vcmp.ge.f32.partialorder %v401, 0.0
  %vm404 = vcmp.ge.f32.partialorder %v402, 0.0
  %v405 = vmul.f32 %v401, 0.2
  %v406 = vmul.f32 %v402, 0.2
  %v407 = vsel %vm403, %v401, %v405
  %v408 = vsel %vm404, %v402, %v406
  %v409 = vsel %vm385, %v407, -1e+30
  %v410 = vsel %vm386, %v408, -1e+30
  %v411 = vsel %vm43, %v409, -inf
  %412 = vmax.xlane.f32.xlu0 %v411
  %v413 = vpop.xlane.xlu0 %412
  %v414 = vsel %vm43, %v410, -inf
  %415 = vmax.xlane.f32.xlu0 %v414
  %v416 = vpop.xlane.xlu0 %415
  %v417 = vsub.f32 %v409, %v413
  %v418 = vsub.f32 %v410, %v416
  %v419 = vmul.f32 %v417, 1.442695
  %v420 = vpow.pop %v419
  %v421 = vmul.f32 %v418, 1.442695
  %v422 = vpow.pop %v421
  %v423 = vsel %vm385, %v420, 0.0
  %v424 = vsel %vm386, %v422, 0.0
  %v425 = vsel %vm43, %v423, 0.0
  %426 = vadd.xlane.f32.xlu0 %v425
  %v427 = vpop.xlane.xlu0 %426
  %v428 = vsel %vm43, %v424, 0.0
  %429 = vadd.xlane.f32.xlu0 %v428
  %v430 = vpop.xlane.xlu0 %429
  %v431 = vmax.f32 %v427, 1e-30
  %v432 = vmax.f32 %v430, 1e-30
  %v433 = vrcp.pop %v431
  %v434 = vrcp.pop %v432
  %v435 = vmul.f32 %v423, %v433
  %v436 = vmul.f32 %v424, %v434
  %v438 = vsel %vm43, %v435, 0
  %v441 = vsel %vm43, %v436, 0
  %443 = vmatprep.subr.mxu0 0.0
  %444 = vmatpush1.msra.mxu0 0.0
  %445 = vmatprep.subr.mxu0 0.0
  %446 = vmatpush1.msra.mxu0 0.0
  %447 = vmatprep.subr.mxu0 0.0
  %448 = vmatpush1.msra.mxu0 0.0
  %449 = vmatprep.subr.mxu0 0.0
  %450 = vmatpush1.msra.mxu0 0.0
  %451 = vmatprep.subr.mxu0 0.0
  %452 = vmatpush1.msra.mxu0 0.0
  %453 = vmatprep.subr.mxu0 0.0
  %454 = vmatpush1.msra.mxu0 0.0
  %455 = vmatprep.subr.mxu0 0.0
  %456 = vmatpush1.msra.mxu0 0.0
  %457 = vmatprep.subr.mxu0 0.0
  %458 = vmatpush1.msra.mxu0 0.0
  %459 = vmatprep.subr.mxu0 0.0
  %460 = vmatpush1.msra.mxu0 0.0
  %461 = vmatprep.subr.mxu0 0.0
  %462 = vmatpush1.msra.mxu0 0.0
  %463 = vmatprep.subr.mxu0 0.0
  %464 = vmatpush1.msra.mxu0 0.0
  %465 = vmatprep.subr.mxu0 0.0
  %466 = vmatpush1.msra.mxu0 0.0
  %467 = vmatprep.subr.mxu0 0.0
  %468 = vmatpush1.msra.mxu0 0.0
  %469 = vmatprep.subr.mxu0 0.0
  %470 = vmatpush1.msra.mxu0 0.0
  %471 = vmatprep.subr.mxu0 0.0
  %472 = vmatpush1.msra.mxu0 %v122
  %473 = vmatprep.subr.mxu0 0.0
  %474 = vmatpush1.msra.mxu0 %v117
  %475 = vmatprep.subr.mxu0 0.0
  %476 = vmatpush2.msra.mxu0 0.0
  %477 = vmatprep.subr.mxu0 0.0
  %478 = vmatpush2.msra.mxu0 0.0
  %479 = vmatprep.subr.mxu0 0.0
  %480 = vmatpush2.msra.mxu0 0.0
  %481 = vmatprep.subr.mxu0 0.0
  %482 = vmatpush2.msra.mxu0 0.0
  %483 = vmatprep.subr.mxu0 0.0
  %484 = vmatpush2.msra.mxu0 0.0
  %485 = vmatprep.subr.mxu0 0.0
  %486 = vmatpush2.msra.mxu0 0.0
  %487 = vmatprep.subr.mxu0 0.0
  %488 = vmatpush2.msra.mxu0 0.0
  %489 = vmatprep.subr.mxu0 0.0
  %490 = vmatpush2.msra.mxu0 0.0
  %491 = vmatprep.subr.mxu0 0.0
  %492 = vmatpush2.msra.mxu0 0.0
  %493 = vmatprep.subr.mxu0 0.0
  %494 = vmatpush2.msra.mxu0 0.0
  %495 = vmatprep.subr.mxu0 0.0
  %496 = vmatpush2.msra.mxu0 0.0
  %497 = vmatprep.subr.mxu0 0.0
  %498 = vmatpush2.msra.mxu0 0.0
  %499 = vmatprep.subr.mxu0 0.0
  %500 = vmatpush2.msra.mxu0 0.0
  %501 = vmatprep.subr.mxu0 0.0
  %502 = vmatpush2.msra.mxu0 0.0
  %503 = vmatprep.subr.mxu0 0.0
  %504 = vmatpush2.msra.mxu0 0.0
  %505 = vmatprep.subr.mxu0 0.0
  %506 = vmatpush2.msra.mxu0 0.0
  %507 = vmatprep.mubr.f32.mxu0 0.0
  %508 = vmatmul.mubr.f32.gmra.mxu0 %v438
  %v509 = vpop.f32.mrf.mxu0
  %v510 = vadd.f32 0.0, %v509
  %v511 = vpop.f32.mrf.mxu0
  %512 = vmatprep.mubr.f32.mxu0 0.0
  %513 = vmatmul.mubr.f32.gmra.mxu0 %v441
  %v514 = vpop.f32.mrf.mxu0
  %v515 = vadd.f32 0.0, %v514
  %v516 = vpop.f32.mrf.mxu0
  %517 = vdwg.mxu0
  %518 = vset.pattern.permute.xlu0 1
  %519 = vperm.xlu0 %518, %v375
  %v520 = vpop.permute.xlu0 %519
  %522 = vset.pattern.permute.xlu0 1
  %523 = vperm.xlu0 %522, %v380
  %v524 = vpop.permute.xlu0 %523
  %v526 = vlaneseq
  %v527 = vshrl.u32 %v526, 7
  %v528 = vsub.s32 1, %v527
  %v529 = vrot.slane %v295, %v528
  %v530 = vadd.f32 %v520, %v529
  %v531 = vadd.f32 %v524, %v529
  %vm532 = vcmp.ge.f32.partialorder %v530, 0.0
  %vm533 = vcmp.ge.f32.partialorder %v531, 0.0
  %v534 = vmul.f32 %v530, 0.2
  %v535 = vmul.f32 %v531, 0.2
  %v536 = vsel %vm532, %v530, %v534
  %v537 = vsel %vm533, %v531, %v535
  %v538 = vsel %vm385, %v536, -1e+30
  %v539 = vsel %vm386, %v537, -1e+30
  %v540 = vsel %vm43, %v538, -inf
  %541 = vmax.xlane.f32.xlu0 %v540
  %v542 = vpop.xlane.xlu0 %541
  %v543 = vsel %vm43, %v539, -inf
  %544 = vmax.xlane.f32.xlu0 %v543
  %v545 = vpop.xlane.xlu0 %544
  %v546 = vsub.f32 %v538, %v542
  %v547 = vsub.f32 %v539, %v545
  %v548 = vmul.f32 %v546, 1.442695
  %v549 = vpow.pop %v548
  %v550 = vmul.f32 %v547, 1.442695
  %v551 = vpow.pop %v550
  %v552 = vsel %vm385, %v549, 0.0
  %v553 = vsel %vm386, %v551, 0.0
  %v554 = vsel %vm43, %v552, 0.0
  %555 = vadd.xlane.f32.xlu0 %v554
  %v556 = vpop.xlane.xlu0 %555
  %v557 = vsel %vm43, %v553, 0.0
  %558 = vadd.xlane.f32.xlu0 %v557
  %v559 = vpop.xlane.xlu0 %558
  %v560 = vmax.f32 %v556, 1e-30
  %v561 = vmax.f32 %v559, 1e-30
  %v562 = vrcp.pop %v560
  %v563 = vrcp.pop %v561
  %v564 = vmul.f32 %v552, %v562
  %v565 = vmul.f32 %v553, %v563
  %566 = vrot.lane.b32.xlu0 %v117, 124
  %v567 = vpop.permute.xlu0 %566
  %568 = vrot.lane.b32.xlu0 %v122, 124
  %v569 = vpop.permute.xlu0 %568
  %v573 = vsel %vm43, %v564, 0
  %v576 = vsel %vm43, %v565, 0
  %578 = vmatprep.subr.mxu0 0.0
  %579 = vmatpush1.msra.mxu0 0.0
  %580 = vmatprep.subr.mxu0 0.0
  %581 = vmatpush1.msra.mxu0 0.0
  %582 = vmatprep.subr.mxu0 0.0
  %583 = vmatpush1.msra.mxu0 0.0
  %584 = vmatprep.subr.mxu0 0.0
  %585 = vmatpush1.msra.mxu0 0.0
  %586 = vmatprep.subr.mxu0 0.0
  %587 = vmatpush1.msra.mxu0 0.0
  %588 = vmatprep.subr.mxu0 0.0
  %589 = vmatpush1.msra.mxu0 0.0
  %590 = vmatprep.subr.mxu0 0.0
  %591 = vmatpush1.msra.mxu0 0.0
  %592 = vmatprep.subr.mxu0 0.0
  %593 = vmatpush1.msra.mxu0 0.0
  %594 = vmatprep.subr.mxu0 0.0
  %595 = vmatpush1.msra.mxu0 0.0
  %596 = vmatprep.subr.mxu0 0.0
  %597 = vmatpush1.msra.mxu0 0.0
  %598 = vmatprep.subr.mxu0 0.0
  %599 = vmatpush1.msra.mxu0 0.0
  %600 = vmatprep.subr.mxu0 0.0
  %601 = vmatpush1.msra.mxu0 0.0
  %602 = vmatprep.subr.mxu0 0.0
  %603 = vmatpush1.msra.mxu0 0.0
  %604 = vmatprep.subr.mxu0 0.0
  %605 = vmatpush1.msra.mxu0 0.0
  %606 = vmatprep.subr.mxu0 0.0
  %607 = vmatpush1.msra.mxu0 %v569
  %608 = vmatprep.subr.mxu0 0.0
  %609 = vmatpush1.msra.mxu0 %v567
  %610 = vmatprep.subr.mxu0 0.0
  %611 = vmatpush2.msra.mxu0 0.0
  %612 = vmatprep.subr.mxu0 0.0
  %613 = vmatpush2.msra.mxu0 0.0
  %614 = vmatprep.subr.mxu0 0.0
  %615 = vmatpush2.msra.mxu0 0.0
  %616 = vmatprep.subr.mxu0 0.0
  %617 = vmatpush2.msra.mxu0 0.0
  %618 = vmatprep.subr.mxu0 0.0
  %619 = vmatpush2.msra.mxu0 0.0
  %620 = vmatprep.subr.mxu0 0.0
  %621 = vmatpush2.msra.mxu0 0.0
  %622 = vmatprep.subr.mxu0 0.0
  %623 = vmatpush2.msra.mxu0 0.0
  %624 = vmatprep.subr.mxu0 0.0
  %625 = vmatpush2.msra.mxu0 0.0
  %626 = vmatprep.subr.mxu0 0.0
  %627 = vmatpush2.msra.mxu0 0.0
  %628 = vmatprep.subr.mxu0 0.0
  %629 = vmatpush2.msra.mxu0 0.0
  %630 = vmatprep.subr.mxu0 0.0
  %631 = vmatpush2.msra.mxu0 0.0
  %632 = vmatprep.subr.mxu0 0.0
  %633 = vmatpush2.msra.mxu0 0.0
  %634 = vmatprep.subr.mxu0 0.0
  %635 = vmatpush2.msra.mxu0 0.0
  %636 = vmatprep.subr.mxu0 0.0
  %637 = vmatpush2.msra.mxu0 0.0
  %638 = vmatprep.subr.mxu0 0.0
  %639 = vmatpush2.msra.mxu0 0.0
  %640 = vmatprep.subr.mxu0 0.0
  %641 = vmatpush2.msra.mxu0 0.0
  %642 = vmatprep.mubr.f32.mxu0 0.0
  %643 = vmatmul.mubr.f32.gmra.mxu0 %v573
  %v644 = vpop.f32.mrf.mxu0
  %v645 = vadd.f32 0.0, %v644
  %v646 = vpop.f32.mrf.mxu0
  %647 = vmatprep.mubr.f32.mxu0 0.0
  %648 = vmatmul.mubr.f32.gmra.mxu0 %v576
  %v649 = vpop.f32.mrf.mxu0
  %v650 = vadd.f32 0.0, %v649
  %v651 = vpop.f32.mrf.mxu0
  %652 = vdwg.mxu0
  %653 = vset.pattern.permute.xlu0 2
  %654 = vperm.xlu0 %653, %v375
  %v655 = vpop.permute.xlu0 %654
  %657 = vset.pattern.permute.xlu0 2
  %658 = vperm.xlu0 %657, %v380
  %v659 = vpop.permute.xlu0 %658
  %v661 = vlaneseq
  %v662 = vshrl.u32 %v661, 7
  %v663 = vsub.s32 2, %v662
  %v664 = vrot.slane %v295, %v663
  %v665 = vadd.f32 %v655, %v664
  %v666 = vadd.f32 %v659, %v664
  %vm667 = vcmp.ge.f32.partialorder %v665, 0.0
  %vm668 = vcmp.ge.f32.partialorder %v666, 0.0
  %v669 = vmul.f32 %v665, 0.2
  %v670 = vmul.f32 %v666, 0.2
  %v671 = vsel %vm667, %v665, %v669
  %v672 = vsel %vm668, %v666, %v670
  %v673 = vsel %vm385, %v671, -1e+30
  %v674 = vsel %vm386, %v672, -1e+30
  %v675 = vsel %vm43, %v673, -inf
  %676 = vmax.xlane.f32.xlu0 %v675
  %v677 = vpop.xlane.xlu0 %676
  %v678 = vsel %vm43, %v674, -inf
  %679 = vmax.xlane.f32.xlu0 %v678
  %v680 = vpop.xlane.xlu0 %679
  %v681 = vsub.f32 %v673, %v677
  %v682 = vsub.f32 %v674, %v680
  %v683 = vmul.f32 %v681, 1.442695
  %v684 = vpow.pop %v683
  %v685 = vmul.f32 %v682, 1.442695
  %v686 = vpow.pop %v685
  %v687 = vsel %vm385, %v684, 0.0
  %v688 = vsel %vm386, %v686, 0.0
  %v689 = vsel %vm43, %v687, 0.0
  %690 = vadd.xlane.f32.xlu0 %v689
  %v691 = vpop.xlane.xlu0 %690
  %v692 = vsel %vm43, %v688, 0.0
  %693 = vadd.xlane.f32.xlu0 %v692
  %v694 = vpop.xlane.xlu0 %693
  %v695 = vmax.f32 %v691, 1e-30
  %v696 = vmax.f32 %v694, 1e-30
  %v697 = vrcp.pop %v695
  %v698 = vrcp.pop %v696
  %v699 = vmul.f32 %v687, %v697
  %v700 = vmul.f32 %v688, %v698
  %701 = vrot.lane.b32.xlu0 %v117, 120
  %v702 = vpop.permute.xlu0 %701
  %703 = vrot.lane.b32.xlu0 %v122, 120
  %v704 = vpop.permute.xlu0 %703
  %v708 = vsel %vm43, %v699, 0
  %v711 = vsel %vm43, %v700, 0
  %713 = vmatprep.subr.mxu0 0.0
  %714 = vmatpush1.msra.mxu0 0.0
  %715 = vmatprep.subr.mxu0 0.0
  %716 = vmatpush1.msra.mxu0 0.0
  %717 = vmatprep.subr.mxu0 0.0
  %718 = vmatpush1.msra.mxu0 0.0
  %719 = vmatprep.subr.mxu0 0.0
  %720 = vmatpush1.msra.mxu0 0.0
  %721 = vmatprep.subr.mxu0 0.0
  %722 = vmatpush1.msra.mxu0 0.0
  %723 = vmatprep.subr.mxu0 0.0
  %724 = vmatpush1.msra.mxu0 0.0
  %725 = vmatprep.subr.mxu0 0.0
  %726 = vmatpush1.msra.mxu0 0.0
  %727 = vmatprep.subr.mxu0 0.0
  %728 = vmatpush1.msra.mxu0 0.0
  %729 = vmatprep.subr.mxu0 0.0
  %730 = vmatpush1.msra.mxu0 0.0
  %731 = vmatprep.subr.mxu0 0.0
  %732 = vmatpush1.msra.mxu0 0.0
  %733 = vmatprep.subr.mxu0 0.0
  %734 = vmatpush1.msra.mxu0 0.0
  %735 = vmatprep.subr.mxu0 0.0
  %736 = vmatpush1.msra.mxu0 0.0
  %737 = vmatprep.subr.mxu0 0.0
  %738 = vmatpush1.msra.mxu0 0.0
  %739 = vmatprep.subr.mxu0 0.0
  %740 = vmatpush1.msra.mxu0 0.0
  %741 = vmatprep.subr.mxu0 0.0
  %742 = vmatpush1.msra.mxu0 %v704
  %743 = vmatprep.subr.mxu0 0.0
  %744 = vmatpush1.msra.mxu0 %v702
  %745 = vmatprep.subr.mxu0 0.0
  %746 = vmatpush2.msra.mxu0 0.0
  %747 = vmatprep.subr.mxu0 0.0
  %748 = vmatpush2.msra.mxu0 0.0
  %749 = vmatprep.subr.mxu0 0.0
  %750 = vmatpush2.msra.mxu0 0.0
  %751 = vmatprep.subr.mxu0 0.0
  %752 = vmatpush2.msra.mxu0 0.0
  %753 = vmatprep.subr.mxu0 0.0
  %754 = vmatpush2.msra.mxu0 0.0
  %755 = vmatprep.subr.mxu0 0.0
  %756 = vmatpush2.msra.mxu0 0.0
  %757 = vmatprep.subr.mxu0 0.0
  %758 = vmatpush2.msra.mxu0 0.0
  %759 = vmatprep.subr.mxu0 0.0
  %760 = vmatpush2.msra.mxu0 0.0
  %761 = vmatprep.subr.mxu0 0.0
  %762 = vmatpush2.msra.mxu0 0.0
  %763 = vmatprep.subr.mxu0 0.0
  %764 = vmatpush2.msra.mxu0 0.0
  %765 = vmatprep.subr.mxu0 0.0
  %766 = vmatpush2.msra.mxu0 0.0
  %767 = vmatprep.subr.mxu0 0.0
  %768 = vmatpush2.msra.mxu0 0.0
  %769 = vmatprep.subr.mxu0 0.0
  %770 = vmatpush2.msra.mxu0 0.0
  %771 = vmatprep.subr.mxu0 0.0
  %772 = vmatpush2.msra.mxu0 0.0
  %773 = vmatprep.subr.mxu0 0.0
  %774 = vmatpush2.msra.mxu0 0.0
  %775 = vmatprep.subr.mxu0 0.0
  %776 = vmatpush2.msra.mxu0 0.0
  %777 = vmatprep.mubr.f32.mxu0 0.0
  %778 = vmatmul.mubr.f32.gmra.mxu0 %v708
  %v779 = vpop.f32.mrf.mxu0
  %v780 = vadd.f32 0.0, %v779
  %v781 = vpop.f32.mrf.mxu0
  %782 = vmatprep.mubr.f32.mxu0 0.0
  %783 = vmatmul.mubr.f32.gmra.mxu0 %v711
  %v784 = vpop.f32.mrf.mxu0
  %v785 = vadd.f32 0.0, %v784
  %v786 = vpop.f32.mrf.mxu0
  %787 = vdwg.mxu0
  %788 = vset.pattern.permute.xlu0 3
  %789 = vperm.xlu0 %788, %v375
  %v790 = vpop.permute.xlu0 %789
  %792 = vset.pattern.permute.xlu0 3
  %793 = vperm.xlu0 %792, %v380
  %v794 = vpop.permute.xlu0 %793
  %v796 = vlaneseq
  %v797 = vshrl.u32 %v796, 7
  %v798 = vsub.s32 3, %v797
  %v799 = vrot.slane %v295, %v798
  %v800 = vadd.f32 %v790, %v799
  %v801 = vadd.f32 %v794, %v799
  %vm802 = vcmp.ge.f32.partialorder %v800, 0.0
  %vm803 = vcmp.ge.f32.partialorder %v801, 0.0
  %v804 = vmul.f32 %v800, 0.2
  %v805 = vmul.f32 %v801, 0.2
  %v806 = vsel %vm802, %v800, %v804
  %v807 = vsel %vm803, %v801, %v805
  %v808 = vsel %vm385, %v806, -1e+30
  %v809 = vsel %vm386, %v807, -1e+30
  %v810 = vsel %vm43, %v808, -inf
  %811 = vmax.xlane.f32.xlu0 %v810
  %v812 = vpop.xlane.xlu0 %811
  %v813 = vsel %vm43, %v809, -inf
  %814 = vmax.xlane.f32.xlu0 %v813
  %v815 = vpop.xlane.xlu0 %814
  %v816 = vsub.f32 %v808, %v812
  %v817 = vsub.f32 %v809, %v815
  %v818 = vmul.f32 %v816, 1.442695
  %v819 = vpow.pop %v818
  %v820 = vmul.f32 %v817, 1.442695
  %v821 = vpow.pop %v820
  %v822 = vsel %vm385, %v819, 0.0
  %v823 = vsel %vm386, %v821, 0.0
  %v824 = vsel %vm43, %v822, 0.0
  %825 = vadd.xlane.f32.xlu0 %v824
  %v826 = vpop.xlane.xlu0 %825
  %v827 = vsel %vm43, %v823, 0.0
  %828 = vadd.xlane.f32.xlu0 %v827
  %v829 = vpop.xlane.xlu0 %828
  %v830 = vmax.f32 %v826, 1e-30
  %v831 = vmax.f32 %v829, 1e-30
  %v832 = vrcp.pop %v830
  %v833 = vrcp.pop %v831
  %v834 = vmul.f32 %v822, %v832
  %v835 = vmul.f32 %v823, %v833
  %836 = vrot.lane.b32.xlu0 %v117, 116
  %v837 = vpop.permute.xlu0 %836
  %838 = vrot.lane.b32.xlu0 %v122, 116
  %v839 = vpop.permute.xlu0 %838
  %v843 = vsel %vm43, %v834, 0
  %v846 = vsel %vm43, %v835, 0
  %848 = vmatprep.subr.mxu0 0.0
  %849 = vmatpush1.msra.mxu0 0.0
  %850 = vmatprep.subr.mxu0 0.0
  %851 = vmatpush1.msra.mxu0 0.0
  %852 = vmatprep.subr.mxu0 0.0
  %853 = vmatpush1.msra.mxu0 0.0
  %854 = vmatprep.subr.mxu0 0.0
  %855 = vmatpush1.msra.mxu0 0.0
  %856 = vmatprep.subr.mxu0 0.0
  %857 = vmatpush1.msra.mxu0 0.0
  %858 = vmatprep.subr.mxu0 0.0
  %859 = vmatpush1.msra.mxu0 0.0
  %860 = vmatprep.subr.mxu0 0.0
  %861 = vmatpush1.msra.mxu0 0.0
  %862 = vmatprep.subr.mxu0 0.0
  %863 = vmatpush1.msra.mxu0 0.0
  %864 = vmatprep.subr.mxu0 0.0
  %865 = vmatpush1.msra.mxu0 0.0
  %866 = vmatprep.subr.mxu0 0.0
  %867 = vmatpush1.msra.mxu0 0.0
  %868 = vmatprep.subr.mxu0 0.0
  %869 = vmatpush1.msra.mxu0 0.0
  %870 = vmatprep.subr.mxu0 0.0
  %871 = vmatpush1.msra.mxu0 0.0
  %872 = vmatprep.subr.mxu0 0.0
  %873 = vmatpush1.msra.mxu0 0.0
  %874 = vmatprep.subr.mxu0 0.0
  %875 = vmatpush1.msra.mxu0 0.0
  %876 = vmatprep.subr.mxu0 0.0
  %877 = vmatpush1.msra.mxu0 %v839
  %878 = vmatprep.subr.mxu0 0.0
  %879 = vmatpush1.msra.mxu0 %v837
  %880 = vmatprep.subr.mxu0 0.0
  %881 = vmatpush2.msra.mxu0 0.0
  %882 = vmatprep.subr.mxu0 0.0
  %883 = vmatpush2.msra.mxu0 0.0
  %884 = vmatprep.subr.mxu0 0.0
  %885 = vmatpush2.msra.mxu0 0.0
  %886 = vmatprep.subr.mxu0 0.0
  %887 = vmatpush2.msra.mxu0 0.0
  %888 = vmatprep.subr.mxu0 0.0
  %889 = vmatpush2.msra.mxu0 0.0
  %890 = vmatprep.subr.mxu0 0.0
  %891 = vmatpush2.msra.mxu0 0.0
  %892 = vmatprep.subr.mxu0 0.0
  %893 = vmatpush2.msra.mxu0 0.0
  %894 = vmatprep.subr.mxu0 0.0
  %895 = vmatpush2.msra.mxu0 0.0
  %896 = vmatprep.subr.mxu0 0.0
  %897 = vmatpush2.msra.mxu0 0.0
  %898 = vmatprep.subr.mxu0 0.0
  %899 = vmatpush2.msra.mxu0 0.0
  %900 = vmatprep.subr.mxu0 0.0
  %901 = vmatpush2.msra.mxu0 0.0
  %902 = vmatprep.subr.mxu0 0.0
  %903 = vmatpush2.msra.mxu0 0.0
  %904 = vmatprep.subr.mxu0 0.0
  %905 = vmatpush2.msra.mxu0 0.0
  %906 = vmatprep.subr.mxu0 0.0
  %907 = vmatpush2.msra.mxu0 0.0
  %908 = vmatprep.subr.mxu0 0.0
  %909 = vmatpush2.msra.mxu0 0.0
  %910 = vmatprep.subr.mxu0 0.0
  %911 = vmatpush2.msra.mxu0 0.0
  %912 = vmatprep.mubr.f32.mxu0 0.0
  %913 = vmatmul.mubr.f32.gmra.mxu0 %v843
  %v914 = vpop.f32.mrf.mxu0
  %v915 = vadd.f32 0.0, %v914
  %v916 = vpop.f32.mrf.mxu0
  %917 = vmatprep.mubr.f32.mxu0 0.0
  %918 = vmatmul.mubr.f32.gmra.mxu0 %v846
  %v919 = vpop.f32.mrf.mxu0
  %v920 = vadd.f32 0.0, %v919
  %v921 = vpop.f32.mrf.mxu0
  %922 = vdwg.mxu0
  %923 = vset.pattern.permute.xlu0 4
  %924 = vperm.xlu0 %923, %v375
  %v925 = vpop.permute.xlu0 %924
  %927 = vset.pattern.permute.xlu0 4
  %928 = vperm.xlu0 %927, %v380
  %v929 = vpop.permute.xlu0 %928
  %v931 = vlaneseq
  %v932 = vshrl.u32 %v931, 7
  %v933 = vsub.s32 4, %v932
  %v934 = vrot.slane %v295, %v933
  %v935 = vadd.f32 %v925, %v934
  %v936 = vadd.f32 %v929, %v934
  %vm937 = vcmp.ge.f32.partialorder %v935, 0.0
  %vm938 = vcmp.ge.f32.partialorder %v936, 0.0
  %v939 = vmul.f32 %v935, 0.2
  %v940 = vmul.f32 %v936, 0.2
  %v941 = vsel %vm937, %v935, %v939
  %v942 = vsel %vm938, %v936, %v940
  %v943 = vsel %vm385, %v941, -1e+30
  %v944 = vsel %vm386, %v942, -1e+30
  %v945 = vsel %vm43, %v943, -inf
  %946 = vmax.xlane.f32.xlu0 %v945
  %v947 = vpop.xlane.xlu0 %946
  %v948 = vsel %vm43, %v944, -inf
  %949 = vmax.xlane.f32.xlu0 %v948
  %v950 = vpop.xlane.xlu0 %949
  %v951 = vsub.f32 %v943, %v947
  %v952 = vsub.f32 %v944, %v950
  %v953 = vmul.f32 %v951, 1.442695
  %v954 = vpow.pop %v953
  %v955 = vmul.f32 %v952, 1.442695
  %v956 = vpow.pop %v955
  %v957 = vsel %vm385, %v954, 0.0
  %v958 = vsel %vm386, %v956, 0.0
  %v959 = vsel %vm43, %v957, 0.0
  %960 = vadd.xlane.f32.xlu0 %v959
  %v961 = vpop.xlane.xlu0 %960
  %v962 = vsel %vm43, %v958, 0.0
  %963 = vadd.xlane.f32.xlu0 %v962
  %v964 = vpop.xlane.xlu0 %963
  %v965 = vmax.f32 %v961, 1e-30
  %v966 = vmax.f32 %v964, 1e-30
  %v967 = vrcp.pop %v965
  %v968 = vrcp.pop %v966
  %v969 = vmul.f32 %v957, %v967
  %v970 = vmul.f32 %v958, %v968
  %971 = vrot.lane.b32.xlu0 %v117, 112
  %v972 = vpop.permute.xlu0 %971
  %973 = vrot.lane.b32.xlu0 %v122, 112
  %v974 = vpop.permute.xlu0 %973
  %v978 = vsel %vm43, %v969, 0
  %v981 = vsel %vm43, %v970, 0
  %983 = vmatprep.subr.mxu0 0.0
  %984 = vmatpush1.msra.mxu0 0.0
  %985 = vmatprep.subr.mxu0 0.0
  %986 = vmatpush1.msra.mxu0 0.0
  %987 = vmatprep.subr.mxu0 0.0
  %988 = vmatpush1.msra.mxu0 0.0
  %989 = vmatprep.subr.mxu0 0.0
  %990 = vmatpush1.msra.mxu0 0.0
  %991 = vmatprep.subr.mxu0 0.0
  %992 = vmatpush1.msra.mxu0 0.0
  %993 = vmatprep.subr.mxu0 0.0
  %994 = vmatpush1.msra.mxu0 0.0
  %995 = vmatprep.subr.mxu0 0.0
  %996 = vmatpush1.msra.mxu0 0.0
  %997 = vmatprep.subr.mxu0 0.0
  %998 = vmatpush1.msra.mxu0 0.0
  %999 = vmatprep.subr.mxu0 0.0
  %1000 = vmatpush1.msra.mxu0 0.0
  %1001 = vmatprep.subr.mxu0 0.0
  %1002 = vmatpush1.msra.mxu0 0.0
  %1003 = vmatprep.subr.mxu0 0.0
  %1004 = vmatpush1.msra.mxu0 0.0
  %1005 = vmatprep.subr.mxu0 0.0
  %1006 = vmatpush1.msra.mxu0 0.0
  %1007 = vmatprep.subr.mxu0 0.0
  %1008 = vmatpush1.msra.mxu0 0.0
  %1009 = vmatprep.subr.mxu0 0.0
  %1010 = vmatpush1.msra.mxu0 0.0
  %1011 = vmatprep.subr.mxu0 0.0
  %1012 = vmatpush1.msra.mxu0 %v974
  %1013 = vmatprep.subr.mxu0 0.0
  %1014 = vmatpush1.msra.mxu0 %v972
  %1015 = vmatprep.subr.mxu0 0.0
  %1016 = vmatpush2.msra.mxu0 0.0
  %1017 = vmatprep.subr.mxu0 0.0
  %1018 = vmatpush2.msra.mxu0 0.0
  %1019 = vmatprep.subr.mxu0 0.0
  %1020 = vmatpush2.msra.mxu0 0.0
  %1021 = vmatprep.subr.mxu0 0.0
  %1022 = vmatpush2.msra.mxu0 0.0
  %1023 = vmatprep.subr.mxu0 0.0
  %1024 = vmatpush2.msra.mxu0 0.0
  %1025 = vmatprep.subr.mxu0 0.0
  %1026 = vmatpush2.msra.mxu0 0.0
  %1027 = vmatprep.subr.mxu0 0.0
  %1028 = vmatpush2.msra.mxu0 0.0
  %1029 = vmatprep.subr.mxu0 0.0
  %1030 = vmatpush2.msra.mxu0 0.0
  %1031 = vmatprep.subr.mxu0 0.0
  %1032 = vmatpush2.msra.mxu0 0.0
  %1033 = vmatprep.subr.mxu0 0.0
  %1034 = vmatpush2.msra.mxu0 0.0
  %1035 = vmatprep.subr.mxu0 0.0
  %1036 = vmatpush2.msra.mxu0 0.0
  %1037 = vmatprep.subr.mxu0 0.0
  %1038 = vmatpush2.msra.mxu0 0.0
  %1039 = vmatprep.subr.mxu0 0.0
  %1040 = vmatpush2.msra.mxu0 0.0
  %1041 = vmatprep.subr.mxu0 0.0
  %1042 = vmatpush2.msra.mxu0 0.0
  %1043 = vmatprep.subr.mxu0 0.0
  %1044 = vmatpush2.msra.mxu0 0.0
  %1045 = vmatprep.subr.mxu0 0.0
  %1046 = vmatpush2.msra.mxu0 0.0
  %1047 = vmatprep.mubr.f32.mxu0 0.0
  %1048 = vmatmul.mubr.f32.gmra.mxu0 %v978
  %v1049 = vpop.f32.mrf.mxu0
  %v1050 = vadd.f32 0.0, %v1049
  %v1051 = vpop.f32.mrf.mxu0
  %1052 = vmatprep.mubr.f32.mxu0 0.0
  %1053 = vmatmul.mubr.f32.gmra.mxu0 %v981
  %v1054 = vpop.f32.mrf.mxu0
  %v1055 = vadd.f32 0.0, %v1054
  %v1056 = vpop.f32.mrf.mxu0
  %1057 = vdwg.mxu0
  %1058 = vset.pattern.permute.xlu0 5
  %1059 = vperm.xlu0 %1058, %v375
  %v1060 = vpop.permute.xlu0 %1059
  %1062 = vset.pattern.permute.xlu0 5
  %1063 = vperm.xlu0 %1062, %v380
  %v1064 = vpop.permute.xlu0 %1063
  %v1066 = vlaneseq
  %v1067 = vshrl.u32 %v1066, 7
  %v1068 = vsub.s32 5, %v1067
  %v1069 = vrot.slane %v295, %v1068
  %v1070 = vadd.f32 %v1060, %v1069
  %v1071 = vadd.f32 %v1064, %v1069
  %vm1072 = vcmp.ge.f32.partialorder %v1070, 0.0
  %vm1073 = vcmp.ge.f32.partialorder %v1071, 0.0
  %v1074 = vmul.f32 %v1070, 0.2
  %v1075 = vmul.f32 %v1071, 0.2
  %v1076 = vsel %vm1072, %v1070, %v1074
  %v1077 = vsel %vm1073, %v1071, %v1075
  %v1078 = vsel %vm385, %v1076, -1e+30
  %v1079 = vsel %vm386, %v1077, -1e+30
  %v1080 = vsel %vm43, %v1078, -inf
  %1081 = vmax.xlane.f32.xlu0 %v1080
  %v1082 = vpop.xlane.xlu0 %1081
  %v1083 = vsel %vm43, %v1079, -inf
  %1084 = vmax.xlane.f32.xlu0 %v1083
  %v1085 = vpop.xlane.xlu0 %1084
  %v1086 = vsub.f32 %v1078, %v1082
  %v1087 = vsub.f32 %v1079, %v1085
  %v1088 = vmul.f32 %v1086, 1.442695
  %v1089 = vpow.pop %v1088
  %v1090 = vmul.f32 %v1087, 1.442695
  %v1091 = vpow.pop %v1090
  %v1092 = vsel %vm385, %v1089, 0.0
  %v1093 = vsel %vm386, %v1091, 0.0
  %v1094 = vsel %vm43, %v1092, 0.0
  %1095 = vadd.xlane.f32.xlu0 %v1094
  %v1096 = vpop.xlane.xlu0 %1095
  %v1097 = vsel %vm43, %v1093, 0.0
  %1098 = vadd.xlane.f32.xlu0 %v1097
  %v1099 = vpop.xlane.xlu0 %1098
  %v1100 = vmax.f32 %v1096, 1e-30
  %v1101 = vmax.f32 %v1099, 1e-30
  %v1102 = vrcp.pop %v1100
  %v1103 = vrcp.pop %v1101
  %v1104 = vmul.f32 %v1092, %v1102
  %v1105 = vmul.f32 %v1093, %v1103
  %1106 = vrot.lane.b32.xlu0 %v117, 108
  %v1107 = vpop.permute.xlu0 %1106
  %1108 = vrot.lane.b32.xlu0 %v122, 108
  %v1109 = vpop.permute.xlu0 %1108
  %v1113 = vsel %vm43, %v1104, 0
  %v1116 = vsel %vm43, %v1105, 0
  %1118 = vmatprep.subr.mxu0 0.0
  %1119 = vmatpush1.msra.mxu0 0.0
  %1120 = vmatprep.subr.mxu0 0.0
  %1121 = vmatpush1.msra.mxu0 0.0
  %1122 = vmatprep.subr.mxu0 0.0
  %1123 = vmatpush1.msra.mxu0 0.0
  %1124 = vmatprep.subr.mxu0 0.0
  %1125 = vmatpush1.msra.mxu0 0.0
  %1126 = vmatprep.subr.mxu0 0.0
  %1127 = vmatpush1.msra.mxu0 0.0
  %1128 = vmatprep.subr.mxu0 0.0
  %1129 = vmatpush1.msra.mxu0 0.0
  %1130 = vmatprep.subr.mxu0 0.0
  %1131 = vmatpush1.msra.mxu0 0.0
  %1132 = vmatprep.subr.mxu0 0.0
  %1133 = vmatpush1.msra.mxu0 0.0
  %1134 = vmatprep.subr.mxu0 0.0
  %1135 = vmatpush1.msra.mxu0 0.0
  %1136 = vmatprep.subr.mxu0 0.0
  %1137 = vmatpush1.msra.mxu0 0.0
  %1138 = vmatprep.subr.mxu0 0.0
  %1139 = vmatpush1.msra.mxu0 0.0
  %1140 = vmatprep.subr.mxu0 0.0
  %1141 = vmatpush1.msra.mxu0 0.0
  %1142 = vmatprep.subr.mxu0 0.0
  %1143 = vmatpush1.msra.mxu0 0.0
  %1144 = vmatprep.subr.mxu0 0.0
  %1145 = vmatpush1.msra.mxu0 0.0
  %1146 = vmatprep.subr.mxu0 0.0
  %1147 = vmatpush1.msra.mxu0 %v1109
  %1148 = vmatprep.subr.mxu0 0.0
  %1149 = vmatpush1.msra.mxu0 %v1107
  %1150 = vmatprep.subr.mxu0 0.0
  %1151 = vmatpush2.msra.mxu0 0.0
  %1152 = vmatprep.subr.mxu0 0.0
  %1153 = vmatpush2.msra.mxu0 0.0
  %1154 = vmatprep.subr.mxu0 0.0
  %1155 = vmatpush2.msra.mxu0 0.0
  %1156 = vmatprep.subr.mxu0 0.0
  %1157 = vmatpush2.msra.mxu0 0.0
  %1158 = vmatprep.subr.mxu0 0.0
  %1159 = vmatpush2.msra.mxu0 0.0
  %1160 = vmatprep.subr.mxu0 0.0
  %1161 = vmatpush2.msra.mxu0 0.0
  %1162 = vmatprep.subr.mxu0 0.0
  %1163 = vmatpush2.msra.mxu0 0.0
  %1164 = vmatprep.subr.mxu0 0.0
  %1165 = vmatpush2.msra.mxu0 0.0
  %1166 = vmatprep.subr.mxu0 0.0
  %1167 = vmatpush2.msra.mxu0 0.0
  %1168 = vmatprep.subr.mxu0 0.0
  %1169 = vmatpush2.msra.mxu0 0.0
  %1170 = vmatprep.subr.mxu0 0.0
  %1171 = vmatpush2.msra.mxu0 0.0
  %1172 = vmatprep.subr.mxu0 0.0
  %1173 = vmatpush2.msra.mxu0 0.0
  %1174 = vmatprep.subr.mxu0 0.0
  %1175 = vmatpush2.msra.mxu0 0.0
  %1176 = vmatprep.subr.mxu0 0.0
  %1177 = vmatpush2.msra.mxu0 0.0
  %1178 = vmatprep.subr.mxu0 0.0
  %1179 = vmatpush2.msra.mxu0 0.0
  %1180 = vmatprep.subr.mxu0 0.0
  %1181 = vmatpush2.msra.mxu0 0.0
  %1182 = vmatprep.mubr.f32.mxu0 0.0
  %1183 = vmatmul.mubr.f32.gmra.mxu0 %v1113
  %v1184 = vpop.f32.mrf.mxu0
  %v1185 = vadd.f32 0.0, %v1184
  %v1186 = vpop.f32.mrf.mxu0
  %1187 = vmatprep.mubr.f32.mxu0 0.0
  %1188 = vmatmul.mubr.f32.gmra.mxu0 %v1116
  %v1189 = vpop.f32.mrf.mxu0
  %v1190 = vadd.f32 0.0, %v1189
  %v1191 = vpop.f32.mrf.mxu0
  %1192 = vdwg.mxu0
  %1193 = vset.pattern.permute.xlu0 6
  %1194 = vperm.xlu0 %1193, %v375
  %v1195 = vpop.permute.xlu0 %1194
  %1197 = vset.pattern.permute.xlu0 6
  %1198 = vperm.xlu0 %1197, %v380
  %v1199 = vpop.permute.xlu0 %1198
  %v1201 = vlaneseq
  %v1202 = vshrl.u32 %v1201, 7
  %v1203 = vsub.s32 6, %v1202
  %v1204 = vrot.slane %v295, %v1203
  %v1205 = vadd.f32 %v1195, %v1204
  %v1206 = vadd.f32 %v1199, %v1204
  %vm1207 = vcmp.ge.f32.partialorder %v1205, 0.0
  %vm1208 = vcmp.ge.f32.partialorder %v1206, 0.0
  %v1209 = vmul.f32 %v1205, 0.2
  %v1210 = vmul.f32 %v1206, 0.2
  %v1211 = vsel %vm1207, %v1205, %v1209
  %v1212 = vsel %vm1208, %v1206, %v1210
  %v1213 = vsel %vm385, %v1211, -1e+30
  %v1214 = vsel %vm386, %v1212, -1e+30
  %v1215 = vsel %vm43, %v1213, -inf
  %1216 = vmax.xlane.f32.xlu0 %v1215
  %v1217 = vpop.xlane.xlu0 %1216
  %v1218 = vsel %vm43, %v1214, -inf
  %1219 = vmax.xlane.f32.xlu0 %v1218
  %v1220 = vpop.xlane.xlu0 %1219
  %v1221 = vsub.f32 %v1213, %v1217
  %v1222 = vsub.f32 %v1214, %v1220
  %v1223 = vmul.f32 %v1221, 1.442695
  %v1224 = vpow.pop %v1223
  %v1225 = vmul.f32 %v1222, 1.442695
  %v1226 = vpow.pop %v1225
  %v1227 = vsel %vm385, %v1224, 0.0
  %v1228 = vsel %vm386, %v1226, 0.0
  %v1229 = vsel %vm43, %v1227, 0.0
  %1230 = vadd.xlane.f32.xlu0 %v1229
  %v1231 = vpop.xlane.xlu0 %1230
  %v1232 = vsel %vm43, %v1228, 0.0
  %1233 = vadd.xlane.f32.xlu0 %v1232
  %v1234 = vpop.xlane.xlu0 %1233
  %v1235 = vmax.f32 %v1231, 1e-30
  %v1236 = vmax.f32 %v1234, 1e-30
  %v1237 = vrcp.pop %v1235
  %v1238 = vrcp.pop %v1236
  %v1239 = vmul.f32 %v1227, %v1237
  %v1240 = vmul.f32 %v1228, %v1238
  %1241 = vrot.lane.b32.xlu0 %v117, 104
  %v1242 = vpop.permute.xlu0 %1241
  %1243 = vrot.lane.b32.xlu0 %v122, 104
  %v1244 = vpop.permute.xlu0 %1243
  %v1248 = vsel %vm43, %v1239, 0
  %v1251 = vsel %vm43, %v1240, 0
  %1253 = vmatprep.subr.mxu0 0.0
  %1254 = vmatpush1.msra.mxu0 0.0
  %1255 = vmatprep.subr.mxu0 0.0
  %1256 = vmatpush1.msra.mxu0 0.0
  %1257 = vmatprep.subr.mxu0 0.0
  %1258 = vmatpush1.msra.mxu0 0.0
  %1259 = vmatprep.subr.mxu0 0.0
  %1260 = vmatpush1.msra.mxu0 0.0
  %1261 = vmatprep.subr.mxu0 0.0
  %1262 = vmatpush1.msra.mxu0 0.0
  %1263 = vmatprep.subr.mxu0 0.0
  %1264 = vmatpush1.msra.mxu0 0.0
  %1265 = vmatprep.subr.mxu0 0.0
  %1266 = vmatpush1.msra.mxu0 0.0
  %1267 = vmatprep.subr.mxu0 0.0
  %1268 = vmatpush1.msra.mxu0 0.0
  %1269 = vmatprep.subr.mxu0 0.0
  %1270 = vmatpush1.msra.mxu0 0.0
  %1271 = vmatprep.subr.mxu0 0.0
  %1272 = vmatpush1.msra.mxu0 0.0
  %1273 = vmatprep.subr.mxu0 0.0
  %1274 = vmatpush1.msra.mxu0 0.0
  %1275 = vmatprep.subr.mxu0 0.0
  %1276 = vmatpush1.msra.mxu0 0.0
  %1277 = vmatprep.subr.mxu0 0.0
  %1278 = vmatpush1.msra.mxu0 0.0
  %1279 = vmatprep.subr.mxu0 0.0
  %1280 = vmatpush1.msra.mxu0 0.0
  %1281 = vmatprep.subr.mxu0 0.0
  %1282 = vmatpush1.msra.mxu0 %v1244
  %1283 = vmatprep.subr.mxu0 0.0
  %1284 = vmatpush1.msra.mxu0 %v1242
  %1285 = vmatprep.subr.mxu0 0.0
  %1286 = vmatpush2.msra.mxu0 0.0
  %1287 = vmatprep.subr.mxu0 0.0
  %1288 = vmatpush2.msra.mxu0 0.0
  %1289 = vmatprep.subr.mxu0 0.0
  %1290 = vmatpush2.msra.mxu0 0.0
  %1291 = vmatprep.subr.mxu0 0.0
  %1292 = vmatpush2.msra.mxu0 0.0
  %1293 = vmatprep.subr.mxu0 0.0
  %1294 = vmatpush2.msra.mxu0 0.0
  %1295 = vmatprep.subr.mxu0 0.0
  %1296 = vmatpush2.msra.mxu0 0.0
  %1297 = vmatprep.subr.mxu0 0.0
  %1298 = vmatpush2.msra.mxu0 0.0
  %1299 = vmatprep.subr.mxu0 0.0
  %1300 = vmatpush2.msra.mxu0 0.0
  %1301 = vmatprep.subr.mxu0 0.0
  %1302 = vmatpush2.msra.mxu0 0.0
  %1303 = vmatprep.subr.mxu0 0.0
  %1304 = vmatpush2.msra.mxu0 0.0
  %1305 = vmatprep.subr.mxu0 0.0
  %1306 = vmatpush2.msra.mxu0 0.0
  %1307 = vmatprep.subr.mxu0 0.0
  %1308 = vmatpush2.msra.mxu0 0.0
  %1309 = vmatprep.subr.mxu0 0.0
  %1310 = vmatpush2.msra.mxu0 0.0
  %1311 = vmatprep.subr.mxu0 0.0
  %1312 = vmatpush2.msra.mxu0 0.0
  %1313 = vmatprep.subr.mxu0 0.0
  %1314 = vmatpush2.msra.mxu0 0.0
  %1315 = vmatprep.subr.mxu0 0.0
  %1316 = vmatpush2.msra.mxu0 0.0
  %1317 = vmatprep.mubr.f32.mxu0 0.0
  %1318 = vmatmul.mubr.f32.gmra.mxu0 %v1248
  %v1319 = vpop.f32.mrf.mxu0
  %v1320 = vadd.f32 0.0, %v1319
  %v1321 = vpop.f32.mrf.mxu0
  %1322 = vmatprep.mubr.f32.mxu0 0.0
  %1323 = vmatmul.mubr.f32.gmra.mxu0 %v1251
  %v1324 = vpop.f32.mrf.mxu0
  %v1325 = vadd.f32 0.0, %v1324
  %v1326 = vpop.f32.mrf.mxu0
  %1327 = vdwg.mxu0
  %1328 = vset.pattern.permute.xlu0 7
  %1329 = vperm.xlu0 %1328, %v375
  %v1330 = vpop.permute.xlu0 %1329
  %1332 = vset.pattern.permute.xlu0 7
  %1333 = vperm.xlu0 %1332, %v380
  %v1334 = vpop.permute.xlu0 %1333
  %v1336 = vlaneseq
  %v1337 = vshrl.u32 %v1336, 7
  %v1338 = vsub.s32 7, %v1337
  %v1339 = vrot.slane %v295, %v1338
  %v1340 = vadd.f32 %v1330, %v1339
  %v1341 = vadd.f32 %v1334, %v1339
  %vm1342 = vcmp.ge.f32.partialorder %v1340, 0.0
  %vm1343 = vcmp.ge.f32.partialorder %v1341, 0.0
  %v1344 = vmul.f32 %v1340, 0.2
  %v1345 = vmul.f32 %v1341, 0.2
  %v1346 = vsel %vm1342, %v1340, %v1344
  %v1347 = vsel %vm1343, %v1341, %v1345
  %v1348 = vsel %vm385, %v1346, -1e+30
  %v1349 = vsel %vm386, %v1347, -1e+30
  %v1350 = vsel %vm43, %v1348, -inf
  %1351 = vmax.xlane.f32.xlu0 %v1350
  %v1352 = vpop.xlane.xlu0 %1351
  %v1353 = vsel %vm43, %v1349, -inf
  %1354 = vmax.xlane.f32.xlu0 %v1353
  %v1355 = vpop.xlane.xlu0 %1354
  %v1356 = vsub.f32 %v1348, %v1352
  %v1357 = vsub.f32 %v1349, %v1355
  %v1358 = vmul.f32 %v1356, 1.442695
  %v1359 = vpow.pop %v1358
  %v1360 = vmul.f32 %v1357, 1.442695
  %v1361 = vpow.pop %v1360
  %v1362 = vsel %vm385, %v1359, 0.0
  %v1363 = vsel %vm386, %v1361, 0.0
  %v1364 = vsel %vm43, %v1362, 0.0
  %1365 = vadd.xlane.f32.xlu0 %v1364
  %v1366 = vpop.xlane.xlu0 %1365
  %v1367 = vsel %vm43, %v1363, 0.0
  %1368 = vadd.xlane.f32.xlu0 %v1367
  %v1369 = vpop.xlane.xlu0 %1368
  %v1370 = vmax.f32 %v1366, 1e-30
  %v1371 = vmax.f32 %v1369, 1e-30
  %v1372 = vrcp.pop %v1370
  %v1373 = vrcp.pop %v1371
  %v1374 = vmul.f32 %v1362, %v1372
  %v1375 = vmul.f32 %v1363, %v1373
  %1376 = vrot.lane.b32.xlu0 %v117, 100
  %v1377 = vpop.permute.xlu0 %1376
  %1378 = vrot.lane.b32.xlu0 %v122, 100
  %v1379 = vpop.permute.xlu0 %1378
  %v1383 = vsel %vm43, %v1374, 0
  %v1386 = vsel %vm43, %v1375, 0
  %1388 = vmatprep.subr.mxu0 0.0
  %1389 = vmatpush1.msra.mxu0 0.0
  %1390 = vmatprep.subr.mxu0 0.0
  %1391 = vmatpush1.msra.mxu0 0.0
  %1392 = vmatprep.subr.mxu0 0.0
  %1393 = vmatpush1.msra.mxu0 0.0
  %1394 = vmatprep.subr.mxu0 0.0
  %1395 = vmatpush1.msra.mxu0 0.0
  %1396 = vmatprep.subr.mxu0 0.0
  %1397 = vmatpush1.msra.mxu0 0.0
  %1398 = vmatprep.subr.mxu0 0.0
  %1399 = vmatpush1.msra.mxu0 0.0
  %1400 = vmatprep.subr.mxu0 0.0
  %1401 = vmatpush1.msra.mxu0 0.0
  %1402 = vmatprep.subr.mxu0 0.0
  %1403 = vmatpush1.msra.mxu0 0.0
  %1404 = vmatprep.subr.mxu0 0.0
  %1405 = vmatpush1.msra.mxu0 0.0
  %1406 = vmatprep.subr.mxu0 0.0
  %1407 = vmatpush1.msra.mxu0 0.0
  %1408 = vmatprep.subr.mxu0 0.0
  %1409 = vmatpush1.msra.mxu0 0.0
  %1410 = vmatprep.subr.mxu0 0.0
  %1411 = vmatpush1.msra.mxu0 0.0
  %1412 = vmatprep.subr.mxu0 0.0
  %1413 = vmatpush1.msra.mxu0 0.0
  %1414 = vmatprep.subr.mxu0 0.0
  %1415 = vmatpush1.msra.mxu0 0.0
  %1416 = vmatprep.subr.mxu0 0.0
  %1417 = vmatpush1.msra.mxu0 %v1379
  %1418 = vmatprep.subr.mxu0 0.0
  %1419 = vmatpush1.msra.mxu0 %v1377
  %1420 = vmatprep.subr.mxu0 0.0
  %1421 = vmatpush2.msra.mxu0 0.0
  %1422 = vmatprep.subr.mxu0 0.0
  %1423 = vmatpush2.msra.mxu0 0.0
  %1424 = vmatprep.subr.mxu0 0.0
  %1425 = vmatpush2.msra.mxu0 0.0
  %1426 = vmatprep.subr.mxu0 0.0
  %1427 = vmatpush2.msra.mxu0 0.0
  %1428 = vmatprep.subr.mxu0 0.0
  %1429 = vmatpush2.msra.mxu0 0.0
  %1430 = vmatprep.subr.mxu0 0.0
  %1431 = vmatpush2.msra.mxu0 0.0
  %1432 = vmatprep.subr.mxu0 0.0
  %1433 = vmatpush2.msra.mxu0 0.0
  %1434 = vmatprep.subr.mxu0 0.0
  %1435 = vmatpush2.msra.mxu0 0.0
  %1436 = vmatprep.subr.mxu0 0.0
  %1437 = vmatpush2.msra.mxu0 0.0
  %1438 = vmatprep.subr.mxu0 0.0
  %1439 = vmatpush2.msra.mxu0 0.0
  %1440 = vmatprep.subr.mxu0 0.0
  %1441 = vmatpush2.msra.mxu0 0.0
  %1442 = vmatprep.subr.mxu0 0.0
  %1443 = vmatpush2.msra.mxu0 0.0
  %1444 = vmatprep.subr.mxu0 0.0
  %1445 = vmatpush2.msra.mxu0 0.0
  %1446 = vmatprep.subr.mxu0 0.0
  %1447 = vmatpush2.msra.mxu0 0.0
  %1448 = vmatprep.subr.mxu0 0.0
  %1449 = vmatpush2.msra.mxu0 0.0
  %1450 = vmatprep.subr.mxu0 0.0
  %1451 = vmatpush2.msra.mxu0 0.0
  %1452 = vmatprep.mubr.f32.mxu0 0.0
  %1453 = vmatmul.mubr.f32.gmra.mxu0 %v1383
  %v1454 = vpop.f32.mrf.mxu0
  %v1455 = vadd.f32 0.0, %v1454
  %v1456 = vpop.f32.mrf.mxu0
  %1457 = vmatprep.mubr.f32.mxu0 0.0
  %1458 = vmatmul.mubr.f32.gmra.mxu0 %v1386
  %v1459 = vpop.f32.mrf.mxu0
  %v1460 = vadd.f32 0.0, %v1459
  %v1461 = vpop.f32.mrf.mxu0
  %1462 = vdwg.mxu0
  %1465 = vrot.lane.b32.xlu0 %v645, 4
  %v1466 = vpop.permute.xlu0 %1465
  %1467 = vrot.lane.b32.xlu0 %v650, 4
  %v1468 = vpop.permute.xlu0 %1467
  %1473 = vrot.lane.b32.xlu0 %v780, 8
  %v1474 = vpop.permute.xlu0 %1473
  %1475 = vrot.lane.b32.xlu0 %v785, 8
  %v1476 = vpop.permute.xlu0 %1475
  %1481 = vrot.lane.b32.xlu0 %v915, 12
  %v1482 = vpop.permute.xlu0 %1481
  %1483 = vrot.lane.b32.xlu0 %v920, 12
  %v1484 = vpop.permute.xlu0 %1483
  %1489 = vrot.lane.b32.xlu0 %v1050, 16
  %v1490 = vpop.permute.xlu0 %1489
  %1491 = vrot.lane.b32.xlu0 %v1055, 16
  %v1492 = vpop.permute.xlu0 %1491
  %1497 = vrot.lane.b32.xlu0 %v1185, 20
  %v1498 = vpop.permute.xlu0 %1497
  %1499 = vrot.lane.b32.xlu0 %v1190, 20
  %v1500 = vpop.permute.xlu0 %1499
  %1505 = vrot.lane.b32.xlu0 %v1320, 24
  %v1506 = vpop.permute.xlu0 %1505
  %1507 = vrot.lane.b32.xlu0 %v1325, 24
  %v1508 = vpop.permute.xlu0 %1507
  %1513 = vrot.lane.b32.xlu0 %v1455, 28
  %v1514 = vpop.permute.xlu0 %1513
  %1515 = vrot.lane.b32.xlu0 %v1460, 28
  %v1516 = vpop.permute.xlu0 %1515
  %vm1519 = vcmask 31744
  %v1520 = vsel %vm1519, %v510, %v1466
  %v1521 = vsel %vm1519, %v515, %v1468
  %vm1522 = vcmask 64512
  %v1523 = vsel %vm1522, %v1520, %v1474
  %v1524 = vsel %vm1522, %v1521, %v1476
  %vm1525 = vcmask 97280
  %v1526 = vsel %vm1525, %v1523, %v1482
  %v1527 = vsel %vm1525, %v1524, %v1484
  %v1528 = vsel %vm43, %v1526, %v1490
  %v1529 = vsel %vm43, %v1527, %v1492
  %vm1530 = vcmask 162816
  %v1531 = vsel %vm1530, %v1528, %v1498
  %v1532 = vsel %vm1530, %v1529, %v1500
  %vm1533 = vcmask 195584
  %v1534 = vsel %vm1533, %v1531, %v1506
  %v1535 = vsel %vm1533, %v1532, %v1508
  %vm1536 = vcmask 228352
  %v1537 = vsel %vm1536, %v1534, %v1514
  %v1538 = vsel %vm1536, %v1535, %v1516
  %v1539 = vmax.f32 %v1537, 0.0
  %v1540 = vmax.f32 %v1538, 0.0
  %1541 = vst.msk [vmem:[%s9] sm:$0xff] %vm218, %v1539
  %1542 = vst.msk [vmem:[%s9 + $0x8] sm:$0xff] %vm218, %v1540
  // Predicated region
  $region38: #{model_forward.5} parent=0 // pred_check
    _
  $region39: #{model_forward.5} parent=0 // pred_check_branch
    %1544 = sbr.rel (0) target = $region41
  $region40: #{model_forward.5} parent=0 // pred_region
    _
  $region41: #{model_forward.5} parent=0 // pred_fallthru
    _
  // Predicated region
  $region42: #{model_forward.5} parent=0 // pred_check
    _
  $region43: #{model_forward.5} parent=0 // pred_check_branch
    %1546 = sbr.rel (0) target = $region45
  $region44: #{model_forward.5} parent=0 // pred_region
    _
  $region45: #{model_forward.5} parent=0 // pred_fallthru
    _

</llo_original>
